<compile_context>
chip_gen: v6e
topology: v6e:2x2x1
jax: 0.10.0
libtpu: 0.0.40
codegen_flags: <defaults>
</compile_context>

<pallas_src>
import functools

import numpy as np

import jax
import jax.numpy as jnp
from jax.experimental import pallas as pl
from jax.experimental.pallas import tpu as pltpu


def _round_up(v, m):
    return (v + m - 1) // m * m


def _conv_mask_np(H, W, Ho, Wo, stride):
    """(9, Ho*Wo) 0/1 mask: does 3x3/pad-1/stride-s tap (kh,kw) at output (i,j)
    read an interior pixel of the (H, W) input (1) or the zero padding (0)?"""
    i, j = np.meshgrid(np.arange(Ho), np.arange(Wo), indexing="ij")
    i = i.reshape(-1)
    j = j.reshape(-1)
    rows = []
    for kh in range(3):
        for kw in range(3):
            ii = stride * i + kh - 1
            jj = stride * j + kw - 1
            rows.append(((ii >= 0) & (ii < H) & (jj >= 0) & (jj < W))
                        .astype(np.float32))
    return np.stack(rows, axis=0)


def _im2col_3x3_pad1(x, stride, Ho, Wo):
    """(N, C, H, W) -> (N, 9*C, Ho*Wo) im2col for a 3x3/pad-1/stride-s conv.
    Pure gather; only used for stride > 1 blocks (stride-1 patches are built
    in-kernel from lane shifts of a halo-padded slab)."""
    N, C, _, _ = x.shape
    xp = jnp.pad(x, ((0, 0), (0, 0), (1, 1), (1, 1)))
    taps = []
    for kh in range(3):
        for kw in range(3):
            taps.append(xp[:, :, kh::stride, kw::stride][:, :, :Ho, :Wo])
    p = jnp.stack(taps, axis=1)                     # (N, 9, C, Ho, Wo)
    return p.reshape(N, 9 * C, Ho * Wo)


# --------------------------------------------------------------------------- #
# Kernel factory (one image = one grid step; all static shapes baked in)
# --------------------------------------------------------------------------- #
def _make_kernel(*, stride, equal_in_out, Cin, Cout, Wo, M, padl):

    def conv3x3_from_halo(wide_ref, w_ref, m_ref):
        # 3x3 / stride-1 conv as 9 per-tap bf16 MXU matmuls, f32 accumulation.
        # Tap (kh,kw) of output lane m reads slab lane m + (kh-1)*Wo + (kw-1);
        # the 0/1 mask kills lanes whose source is the conv zero padding (or
        # would wrap into a neighbouring row of the same image).
        acc = jnp.zeros((Cout, M), jnp.float32)
        for kh in range(3):
            for kw in range(3):
                t = kh * 3 + kw
                st = padl + (kh - 1) * Wo + (kw - 1)          # static offset
                patch = wide_ref[:, st:st + M] * m_ref[t:t + 1, :]
                acc = acc + jnp.dot(w_ref[t * Cout:(t + 1) * Cout, :],
                                    patch.astype(jnp.bfloat16),
                                    preferred_element_type=jnp.float32)
        return acc

    def conv2_and_store(h, params_ref, m2_ref, w2_ref, hwide_ref, sc, o_ref):
        b3 = params_ref[3]
        gain = params_ref[4]
        zeros_halo = jnp.zeros((Cout, padl), jnp.float32)
        hwide_ref[:, 0:padl] = zeros_halo                     # conv zero padding
        hwide_ref[:, padl + M:padl + M + padl] = zeros_halo
        hwide_ref[:, padl:padl + M] = h                       # lane-aligned store
        y2 = conv3x3_from_halo(hwide_ref, w2_ref, m2_ref)
        o_ref[...] = (gain * y2 + b3 + sc).astype(o_ref.dtype)

    if stride == 1:
        def stride1_body(params_ref, m_ref, x_ref, w1_ref, w2_ref, wsc_ref,
                         o_ref, xwide_ref, hwide_ref):
            b0 = params_ref[0]
            b1 = params_ref[1]
            b2 = params_ref[2]
            x = x_ref[...]                                    # (Cin, M) f32
            # conv1 input slab: (x + b0) interior, zero halo (== conv padding
            # of (x + b0), which is zero, not b0).
            zeros_halo = jnp.zeros((Cin, padl), jnp.float32)
            xwide_ref[:, 0:padl] = zeros_halo
            xwide_ref[:, padl + M:padl + M + padl] = zeros_halo
            xwide_ref[:, padl:padl + M] = x + b0
            y1 = conv3x3_from_halo(xwide_ref, w1_ref, m_ref)
            h = jnp.maximum(y1 + b1, 0.0) + b2
            if wsc_ref is None:
                sc = x                                        # identity: x, NOT relu(x)
            else:
                sc = jnp.dot(wsc_ref[...],
                             jnp.maximum(x, 0.0).astype(jnp.bfloat16),
                             preferred_element_type=jnp.float32)
            conv2_and_store(h, params_ref, m_ref, w2_ref, hwide_ref, sc, o_ref)

        if equal_in_out:
            def kernel(params_ref, m_ref, x_ref, w1_ref, w2_ref,
                       o_ref, xwide_ref, hwide_ref):
                stride1_body(params_ref, m_ref, x_ref, w1_ref, w2_ref, None,
                             o_ref, xwide_ref, hwide_ref)
        else:
            def kernel(params_ref, m_ref, x_ref, w1_ref, w2_ref, wsc_ref,
                       o_ref, xwide_ref, hwide_ref):
                stride1_body(params_ref, m_ref, x_ref, w1_ref, w2_ref, wsc_ref,
                             o_ref, xwide_ref, hwide_ref)
        return kernel

    # stride > 1: conv1 patches arrive as a per-image im2col slab (wrapper
    # gather); still per-tap accumulation, no big matmul scratch.
    def kernel(params_ref, m1_ref, m2_ref, p1_ref, xs_ref, w1_ref, w2_ref,
               wsc_ref, o_ref, hwide_ref):
        b0 = params_ref[0]
        b1 = params_ref[1]
        b2 = params_ref[2]
        acc = jnp.zeros((Cout, M), jnp.float32)
        for t in range(9):
            # (x + b0) with zero halo: add b0 only where the patch is interior.
            patch = p1_ref[t * Cin:(t + 1) * Cin, :] + b0 * m1_ref[t:t + 1, :]
            acc = acc + jnp.dot(w1_ref[t * Cout:(t + 1) * Cout, :],
                                patch.astype(jnp.bfloat16),
                                preferred_element_type=jnp.float32)
        h = jnp.maximum(acc + b1, 0.0) + b2
        sc = jnp.dot(wsc_ref[...],
                     jnp.maximum(xs_ref[...], 0.0).astype(jnp.bfloat16),
                     preferred_element_type=jnp.float32)
        conv2_and_store(h, params_ref, m2_ref, w2_ref, hwide_ref, sc, o_ref)

    return kernel


# --------------------------------------------------------------------------- #
# Wrapper (layout-only glue around the kernel)
# --------------------------------------------------------------------------- #
@functools.partial(jax.jit, static_argnames=("stride",))
def basic_block_forward(x_nchw, w1, w2, wsc, biases, gain, *, stride):
    """BasicBlock.forward. x_nchw (N,Cin,H,W); weights in PyTorch OIHW; NCHW out."""
    N, Cin, H, W = x_nchw.shape
    Cout = w1.shape[0]
    equal_in_out = (Cin == Cout)
    if equal_in_out:
        assert stride == 1, "identity shortcut requires stride == 1"
    else:
        assert wsc is not None, "channel change requires convShortcut weights"
    Ho = (H + 2 - 3) // stride + 1
    Wo = (W + 2 - 3) // stride + 1
    M = Ho * Wo                          # per-image lane count
    padl = _round_up(Wo + 1, 128)        # lane-aligned halo width

    x = x_nchw.astype(jnp.float32)

    # Weights as per-tap (9*Cout, Cin_k) bf16 slabs (MXU operands, f32 accum).
    w1taps = jnp.transpose(w1, (2, 3, 0, 1)).reshape(9 * Cout, Cin).astype(jnp.bfloat16)
    w2taps = jnp.transpose(w2, (2, 3, 0, 1)).reshape(9 * Cout, Cout).astype(jnp.bfloat16)
    params = jnp.concatenate([jnp.reshape(biases, (4,)).astype(jnp.float32),
                              jnp.reshape(gain, (1,)).astype(jnp.float32)])

    m2 = jnp.asarray(_conv_mask_np(Ho, Wo, Ho, Wo, 1))           # conv2 mask (9, M)

    kernel = _make_kernel(stride=stride, equal_in_out=equal_in_out,
                          Cin=Cin, Cout=Cout, Wo=Wo, M=M, padl=padl)

    smem_spec = pl.BlockSpec(memory_space=pltpu.MemorySpace.SMEM)

    if stride == 1:
        inputs = [params, m2, x.reshape(N, Cin, M), w1taps, w2taps]
        in_specs = [
            smem_spec,
            pl.BlockSpec((9, M), lambda n: (0, 0)),
            pl.BlockSpec((None, Cin, M), lambda n: (n, 0, 0)),
            pl.BlockSpec((9 * Cout, Cin), lambda n: (0, 0)),
            pl.BlockSpec((9 * Cout, Cout), lambda n: (0, 0)),
        ]
        if not equal_in_out:
            inputs.append(wsc[:, :, 0, 0].astype(jnp.bfloat16))
            in_specs.append(pl.BlockSpec((Cout, Cin), lambda n: (0, 0)))
        scratch_shapes = [pltpu.VMEM((Cin, M + 2 * padl), jnp.float32),
                          pltpu.VMEM((Cout, M + 2 * padl), jnp.float32)]
    else:
        m1 = jnp.asarray(_conv_mask_np(H, W, Ho, Wo, stride))    # conv1 mask (9, M)
        p1 = _im2col_3x3_pad1(x, stride, Ho, Wo)                 # (N, 9*Cin, M)
        xs = x[:, :, ::stride, ::stride][:, :, :Ho, :Wo].reshape(N, Cin, M)
        inputs = [params, m1, m2, p1, xs, w1taps, w2taps,
                  wsc[:, :, 0, 0].astype(jnp.bfloat16)]
        in_specs = [
            smem_spec,
            pl.BlockSpec((9, M), lambda n: (0, 0)),
            pl.BlockSpec((9, M), lambda n: (0, 0)),
            pl.BlockSpec((None, 9 * Cin, M), lambda n: (n, 0, 0)),
            pl.BlockSpec((None, Cin, M), lambda n: (n, 0, 0)),
            pl.BlockSpec((9 * Cout, Cin), lambda n: (0, 0)),
            pl.BlockSpec((9 * Cout, Cout), lambda n: (0, 0)),
            pl.BlockSpec((Cout, Cin), lambda n: (0, 0)),
        ]
        scratch_shapes = [pltpu.VMEM((Cout, M + 2 * padl), jnp.float32)]

    flops = 2 * N * M * (9 * Cin * Cout + 9 * Cout * Cout
                         + (0 if equal_in_out else Cin * Cout))
    bytes_accessed = int(sum(int(np.prod(a.shape)) * a.dtype.itemsize
                             for a in inputs) + N * Cout * M * 4)

    out_cm = pl.pallas_call(
        kernel,
        out_shape=jax.ShapeDtypeStruct((N, Cout, M), jnp.float32),
        grid=(N,),
        in_specs=in_specs,
        out_specs=pl.BlockSpec((None, Cout, M), lambda n: (n, 0, 0)),
        scratch_shapes=scratch_shapes,
        compiler_params=pltpu.CompilerParams(
            dimension_semantics=("parallel",),
            vmem_limit_bytes=32 * 1024 * 1024),
        cost_estimate=pl.CostEstimate(flops=flops, transcendentals=0,
                                      bytes_accessed=bytes_accessed),
    )(*inputs)

    # (N, Cout, Ho*Wo) is NCHW modulo a reshape: no transpose / extra HBM pass.
    return out_cm.reshape(N, Cout, Ho, Wo)


# --------------------------------------------------------------------------- #
# Pure-XLA reference and self-test
# --------------------------------------------------------------------------- #
def _reference(x, w1, w2, wsc, biases, gain, stride):
    hi = jax.lax.Precision.HIGHEST
    dn = ("NCHW", "OIHW", "NCHW")
    b0, b1, b2, b3 = (biases[i] for i in range(4))
    out = x + b0
    out = jax.lax.conv_general_dilated(out, w1, (stride, stride), ((1, 1), (1, 1)),
                                       dimension_numbers=dn, precision=hi) + b1
    out = jnp.maximum(out, 0.0) + b2
    out = gain * jax.lax.conv_general_dilated(out, w2, (1, 1), ((1, 1), (1, 1)),
                                              dimension_numbers=dn, precision=hi) + b3
    if wsc is None:
        sc = x
    else:
        sc = jax.lax.conv_general_dilated(jnp.maximum(x, 0.0), wsc, (stride, stride),
                                          ((0, 0), (0, 0)), dimension_numbers=dn,
                                          precision=hi)
    return out + sc


def _run_case(name, key, N, Cin, Cout, H, W, stride, with_shortcut):
    k_x, k_w1, k_w2, k_ws, k_b, k_g = jax.random.split(key, 6)
    x = jax.random.normal(k_x, (N, Cin, H, W), jnp.float32)
    w1 = 0.2 * jax.random.normal(k_w1, (Cout, Cin, 3, 3), jnp.float32)
    w2 = 0.2 * jax.random.normal(k_w2, (Cout, Cout, 3, 3), jnp.float32)
    wsc = (0.2 * jax.random.normal(k_ws, (Cout, Cin, 1, 1), jnp.float32)
           if with_shortcut else None)
    biases = 0.1 * jax.random.normal(k_b, (4,), jnp.float32)      # module init: zeros
    gain = 1.0 + 0.1 * jax.random.normal(k_g, (1,), jnp.float32)  # module init: ones

    out = jax.block_until_ready(
        basic_block_forward(x, w1, w2, wsc, biases, gain, stride=stride))
    ref = jax.block_until_ready(
        _reference(x, w1, w2, wsc, biases, gain[0], stride))

    Ho = (H + 2 - 3) // stride + 1
    Wo = (W + 2 - 3) // stride + 1
    assert out.shape == (N, Cout, Ho, Wo), (name, out.shape)
    err = float(jnp.max(jnp.abs(out - ref)))
    # bf16 MXU operands (f32 accumulation) vs an all-f32 HIGHEST reference.
    tol = 5e-2 * max(1.0, float(jnp.max(jnp.abs(ref))))
    assert err <= tol, f"{name}: max abs err {err} > tol {tol}"


if __name__ == "__main__":
    key = jax.random.PRNGKey(0)
    k1, k2 = jax.random.split(key)

    # BasicBlock(in_planes=4, out_planes=8, stride=2): conv-shortcut path.
    _run_case("downsample_block", k1, N=2, Cin=4, Cout=8, H=16, W=16,
              stride=2, with_shortcut=True)

    # BasicBlock(in_planes=8, out_planes=8, stride=1): identity-shortcut path.
    _run_case("identity_block", k2, N=2, Cin=8, Cout=8, H=16, W=16,
              stride=1, with_shortcut=False)

    print("KERNEL_OK")
</pallas_src>

<mosaic_0001>
module attributes {stable_mosaic.version = 11 : i64} {
  func.func @kernel(%arg0: i32, %arg1: memref<5xf32, #tpu.memory_space<smem>>, %arg2: memref<9x64xf32, #tpu.memory_space<vmem>>, %arg3: memref<9x64xf32, #tpu.memory_space<vmem>>, %arg4: memref<1x36x64xf32, #tpu.memory_space<vmem>>, %arg5: memref<1x4x64xf32, #tpu.memory_space<vmem>>, %arg6: memref<72x4xbf16, #tpu.memory_space<vmem>>, %arg7: memref<72x8xbf16, #tpu.memory_space<vmem>>, %arg8: memref<8x4xbf16, #tpu.memory_space<vmem>>, %arg9: memref<1x8x64xf32, #tpu.memory_space<vmem>>, %arg10: memref<8x320xf32, #tpu.memory_space<vmem>>) attributes {dimension_semantics = [#tpu.dimension_semantics<parallel>], iteration_bounds = array<i64: 2>, scalar_prefetch = 0 : i64, scratch_operands = 1 : i64, tpu.core_type = #tpu.core_type<tc>, window_params = [{transform_indices = @transform_0, window_bounds = array<i64: 5>}, {pipeline_mode = #tpu.pipeline_mode<synchronous>, transform_indices = @transform_1, window_bounds = array<i64: 9, 64>}, {pipeline_mode = #tpu.pipeline_mode<synchronous>, transform_indices = @transform_2, window_bounds = array<i64: 9, 64>}, {transform_indices = @transform_3, window_bounds = array<i64: 1, 36, 64>}, {transform_indices = @transform_4, window_bounds = array<i64: 1, 4, 64>}, {pipeline_mode = #tpu.pipeline_mode<synchronous>, transform_indices = @transform_5, window_bounds = array<i64: 72, 4>}, {pipeline_mode = #tpu.pipeline_mode<synchronous>, transform_indices = @transform_6, window_bounds = array<i64: 72, 8>}, {pipeline_mode = #tpu.pipeline_mode<synchronous>, transform_indices = @transform_7, window_bounds = array<i64: 8, 4>}, {transform_indices = @transform_8, window_bounds = array<i64: 1, 8, 64>}]} {
    %c0 = arith.constant 0 : index
    %0 = memref.load %arg1[%c0] : memref<5xf32, #tpu.memory_space<smem>>
    %c1 = arith.constant 1 : index
    %1 = memref.load %arg1[%c1] : memref<5xf32, #tpu.memory_space<smem>>
    %c2 = arith.constant 2 : index
    %2 = memref.load %arg1[%c2] : memref<5xf32, #tpu.memory_space<smem>>
    %cst = arith.constant 0.000000e+00 : f32
    %3 = vector.broadcast %cst : f32 to vector<8x64xf32>
    %c0_0 = arith.constant 0 : index
    %c0_1 = arith.constant 0 : index
    %c0_2 = arith.constant 0 : index
    %4 = vector.load %arg4[%c0_0, %c0_1, %c0_2] : memref<1x36x64xf32, #tpu.memory_space<vmem>>, vector<1x4x64xf32>
    %5 = vector.shape_cast %4 : vector<1x4x64xf32> to vector<4x64xf32>
    %c0_3 = arith.constant 0 : index
    %c0_4 = arith.constant 0 : index
    %6 = vector.load %arg2[%c0_3, %c0_4] : memref<9x64xf32, #tpu.memory_space<vmem>>, vector<1x64xf32>
    %7 = vector.broadcast %0 : f32 to vector<1x64xf32>
    %8 = arith.mulf %7, %6 : vector<1x64xf32>
    %9 = vector.broadcast %8 : vector<1x64xf32> to vector<4x64xf32>
    %10 = arith.addf %5, %9 : vector<4x64xf32>
    %c0_5 = arith.constant 0 : index
    %c0_6 = arith.constant 0 : index
    %11 = vector.load %arg6[%c0_5, %c0_6] : memref<72x4xbf16, #tpu.memory_space<vmem>>, vector<8x4xbf16>
    %12 = arith.truncf %10 : vector<4x64xf32> to vector<4x64xbf16>
    %cst_7 = arith.constant dense<0.000000e+00> : vector<8x64xf32>
    %13 = tpu.matmul %11, %12, %cst_7 {dimension_numbers = #tpu.dot_dimension_numbers<[1], [0], [0], [1], [0, 0, 1, 1], [], []>} : vector<8x4xbf16>, vector<4x64xbf16>, vector<8x64xf32> -> vector<8x64xf32>
    %14 = arith.addf %3, %13 : vector<8x64xf32>
    %c0_8 = arith.constant 0 : index
    %c4 = arith.constant 4 : index
    %c0_9 = arith.constant 0 : index
    %15 = vector.load %arg4[%c0_8, %c4, %c0_9] : memref<1x36x64xf32, #tpu.memory_space<vmem>>, vector<1x4x64xf32>
    %16 = vector.shape_cast %15 : vector<1x4x64xf32> to vector<4x64xf32>
    %c1_10 = arith.constant 1 : index
    %c0_11 = arith.constant 0 : index
    %17 = vector.load %arg2[%c1_10, %c0_11] : memref<9x64xf32, #tpu.memory_space<vmem>>, vector<1x64xf32>
    %18 = vector.broadcast %0 : f32 to vector<1x64xf32>
    %19 = arith.mulf %18, %17 : vector<1x64xf32>
    %20 = vector.broadcast %19 : vector<1x64xf32> to vector<4x64xf32>
    %21 = arith.addf %16, %20 : vector<4x64xf32>
    %c8 = arith.constant 8 : index
    %c0_12 = arith.constant 0 : index
    %22 = vector.load %arg6[%c8, %c0_12] : memref<72x4xbf16, #tpu.memory_space<vmem>>, vector<8x4xbf16>
    %23 = arith.truncf %21 : vector<4x64xf32> to vector<4x64xbf16>
    %cst_13 = arith.constant dense<0.000000e+00> : vector<8x64xf32>
    %24 = tpu.matmul %22, %23, %cst_13 {dimension_numbers = #tpu.dot_dimension_numbers<[1], [0], [0], [1], [0, 0, 1, 1], [], []>} : vector<8x4xbf16>, vector<4x64xbf16>, vector<8x64xf32> -> vector<8x64xf32>
    %25 = arith.addf %14, %24 : vector<8x64xf32>
    %c0_14 = arith.constant 0 : index
    %c8_15 = arith.constant 8 : index
    %c0_16 = arith.constant 0 : index
    %26 = vector.load %arg4[%c0_14, %c8_15, %c0_16] : memref<1x36x64xf32, #tpu.memory_space<vmem>>, vector<1x4x64xf32>
    %27 = vector.shape_cast %26 : vector<1x4x64xf32> to vector<4x64xf32>
    %c2_17 = arith.constant 2 : index
    %c0_18 = arith.constant 0 : index
    %28 = vector.load %arg2[%c2_17, %c0_18] : memref<9x64xf32, #tpu.memory_space<vmem>>, vector<1x64xf32>
    %29 = vector.broadcast %0 : f32 to vector<1x64xf32>
    %30 = arith.mulf %29, %28 : vector<1x64xf32>
    %31 = vector.broadcast %30 : vector<1x64xf32> to vector<4x64xf32>
    %32 = arith.addf %27, %31 : vector<4x64xf32>
    %c16 = arith.constant 16 : index
    %c0_19 = arith.constant 0 : index
    %33 = vector.load %arg6[%c16, %c0_19] : memref<72x4xbf16, #tpu.memory_space<vmem>>, vector<8x4xbf16>
    %34 = arith.truncf %32 : vector<4x64xf32> to vector<4x64xbf16>
    %cst_20 = arith.constant dense<0.000000e+00> : vector<8x64xf32>
    %35 = tpu.matmul %33, %34, %cst_20 {dimension_numbers = #tpu.dot_dimension_numbers<[1], [0], [0], [1], [0, 0, 1, 1], [], []>} : vector<8x4xbf16>, vector<4x64xbf16>, vector<8x64xf32> -> vector<8x64xf32>
    %36 = arith.addf %25, %35 : vector<8x64xf32>
    %c0_21 = arith.constant 0 : index
    %c12 = arith.constant 12 : index
    %c0_22 = arith.constant 0 : index
    %37 = vector.load %arg4[%c0_21, %c12, %c0_22] : memref<1x36x64xf32, #tpu.memory_space<vmem>>, vector<1x4x64xf32>
    %38 = vector.shape_cast %37 : vector<1x4x64xf32> to vector<4x64xf32>
    %c3 = arith.constant 3 : index
    %c0_23 = arith.constant 0 : index
    %39 = vector.load %arg2[%c3, %c0_23] : memref<9x64xf32, #tpu.memory_space<vmem>>, vector<1x64xf32>
    %40 = vector.broadcast %0 : f32 to vector<1x64xf32>
    %41 = arith.mulf %40, %39 : vector<1x64xf32>
    %42 = vector.broadcast %41 : vector<1x64xf32> to vector<4x64xf32>
    %43 = arith.addf %38, %42 : vector<4x64xf32>
    %c24 = arith.constant 24 : index
    %c0_24 = arith.constant 0 : index
    %44 = vector.load %arg6[%c24, %c0_24] : memref<72x4xbf16, #tpu.memory_space<vmem>>, vector<8x4xbf16>
    %45 = arith.truncf %43 : vector<4x64xf32> to vector<4x64xbf16>
    %cst_25 = arith.constant dense<0.000000e+00> : vector<8x64xf32>
    %46 = tpu.matmul %44, %45, %cst_25 {dimension_numbers = #tpu.dot_dimension_numbers<[1], [0], [0], [1], [0, 0, 1, 1], [], []>} : vector<8x4xbf16>, vector<4x64xbf16>, vector<8x64xf32> -> vector<8x64xf32>
    %47 = arith.addf %36, %46 : vector<8x64xf32>
    %c0_26 = arith.constant 0 : index
    %c16_27 = arith.constant 16 : index
    %c0_28 = arith.constant 0 : index
    %48 = vector.load %arg4[%c0_26, %c16_27, %c0_28] : memref<1x36x64xf32, #tpu.memory_space<vmem>>, vector<1x4x64xf32>
    %49 = vector.shape_cast %48 : vector<1x4x64xf32> to vector<4x64xf32>
    %c4_29 = arith.constant 4 : index
    %c0_30 = arith.constant 0 : index
    %50 = vector.load %arg2[%c4_29, %c0_30] : memref<9x64xf32, #tpu.memory_space<vmem>>, vector<1x64xf32>
    %51 = vector.broadcast %0 : f32 to vector<1x64xf32>
    %52 = arith.mulf %51, %50 : vector<1x64xf32>
    %53 = vector.broadcast %52 : vector<1x64xf32> to vector<4x64xf32>
    %54 = arith.addf %49, %53 : vector<4x64xf32>
    %c32 = arith.constant 32 : index
    %c0_31 = arith.constant 0 : index
    %55 = vector.load %arg6[%c32, %c0_31] : memref<72x4xbf16, #tpu.memory_space<vmem>>, vector<8x4xbf16>
    %56 = arith.truncf %54 : vector<4x64xf32> to vector<4x64xbf16>
    %cst_32 = arith.constant dense<0.000000e+00> : vector<8x64xf32>
    %57 = tpu.matmul %55, %56, %cst_32 {dimension_numbers = #tpu.dot_dimension_numbers<[1], [0], [0], [1], [0, 0, 1, 1], [], []>} : vector<8x4xbf16>, vector<4x64xbf16>, vector<8x64xf32> -> vector<8x64xf32>
    %58 = arith.addf %47, %57 : vector<8x64xf32>
    %c0_33 = arith.constant 0 : index
    %c20 = arith.constant 20 : index
    %c0_34 = arith.constant 0 : index
    %59 = vector.load %arg4[%c0_33, %c20, %c0_34] : memref<1x36x64xf32, #tpu.memory_space<vmem>>, vector<1x4x64xf32>
    %60 = vector.shape_cast %59 : vector<1x4x64xf32> to vector<4x64xf32>
    %c5 = arith.constant 5 : index
    %c0_35 = arith.constant 0 : index
    %61 = vector.load %arg2[%c5, %c0_35] : memref<9x64xf32, #tpu.memory_space<vmem>>, vector<1x64xf32>
    %62 = vector.broadcast %0 : f32 to vector<1x64xf32>
    %63 = arith.mulf %62, %61 : vector<1x64xf32>
    %64 = vector.broadcast %63 : vector<1x64xf32> to vector<4x64xf32>
    %65 = arith.addf %60, %64 : vector<4x64xf32>
    %c40 = arith.constant 40 : index
    %c0_36 = arith.constant 0 : index
    %66 = vector.load %arg6[%c40, %c0_36] : memref<72x4xbf16, #tpu.memory_space<vmem>>, vector<8x4xbf16>
    %67 = arith.truncf %65 : vector<4x64xf32> to vector<4x64xbf16>
    %cst_37 = arith.constant dense<0.000000e+00> : vector<8x64xf32>
    %68 = tpu.matmul %66, %67, %cst_37 {dimension_numbers = #tpu.dot_dimension_numbers<[1], [0], [0], [1], [0, 0, 1, 1], [], []>} : vector<8x4xbf16>, vector<4x64xbf16>, vector<8x64xf32> -> vector<8x64xf32>
    %69 = arith.addf %58, %68 : vector<8x64xf32>
    %c0_38 = arith.constant 0 : index
    %c24_39 = arith.constant 24 : index
    %c0_40 = arith.constant 0 : index
    %70 = vector.load %arg4[%c0_38, %c24_39, %c0_40] : memref<1x36x64xf32, #tpu.memory_space<vmem>>, vector<1x4x64xf32>
    %71 = vector.shape_cast %70 : vector<1x4x64xf32> to vector<4x64xf32>
    %c6 = arith.constant 6 : index
    %c0_41 = arith.constant 0 : index
    %72 = vector.load %arg2[%c6, %c0_41] : memref<9x64xf32, #tpu.memory_space<vmem>>, vector<1x64xf32>
    %73 = vector.broadcast %0 : f32 to vector<1x64xf32>
    %74 = arith.mulf %73, %72 : vector<1x64xf32>
    %75 = vector.broadcast %74 : vector<1x64xf32> to vector<4x64xf32>
    %76 = arith.addf %71, %75 : vector<4x64xf32>
    %c48 = arith.constant 48 : index
    %c0_42 = arith.constant 0 : index
    %77 = vector.load %arg6[%c48, %c0_42] : memref<72x4xbf16, #tpu.memory_space<vmem>>, vector<8x4xbf16>
    %78 = arith.truncf %76 : vector<4x64xf32> to vector<4x64xbf16>
    %cst_43 = arith.constant dense<0.000000e+00> : vector<8x64xf32>
    %79 = tpu.matmul %77, %78, %cst_43 {dimension_numbers = #tpu.dot_dimension_numbers<[1], [0], [0], [1], [0, 0, 1, 1], [], []>} : vector<8x4xbf16>, vector<4x64xbf16>, vector<8x64xf32> -> vector<8x64xf32>
    %80 = arith.addf %69, %79 : vector<8x64xf32>
    %c0_44 = arith.constant 0 : index
    %c28 = arith.constant 28 : index
    %c0_45 = arith.constant 0 : index
    %81 = vector.load %arg4[%c0_44, %c28, %c0_45] : memref<1x36x64xf32, #tpu.memory_space<vmem>>, vector<1x4x64xf32>
    %82 = vector.shape_cast %81 : vector<1x4x64xf32> to vector<4x64xf32>
    %c7 = arith.constant 7 : index
    %c0_46 = arith.constant 0 : index
    %83 = vector.load %arg2[%c7, %c0_46] : memref<9x64xf32, #tpu.memory_space<vmem>>, vector<1x64xf32>
    %84 = vector.broadcast %0 : f32 to vector<1x64xf32>
    %85 = arith.mulf %84, %83 : vector<1x64xf32>
    %86 = vector.broadcast %85 : vector<1x64xf32> to vector<4x64xf32>
    %87 = arith.addf %82, %86 : vector<4x64xf32>
    %c56 = arith.constant 56 : index
    %c0_47 = arith.constant 0 : index
    %88 = vector.load %arg6[%c56, %c0_47] : memref<72x4xbf16, #tpu.memory_space<vmem>>, vector<8x4xbf16>
    %89 = arith.truncf %87 : vector<4x64xf32> to vector<4x64xbf16>
    %cst_48 = arith.constant dense<0.000000e+00> : vector<8x64xf32>
    %90 = tpu.matmul %88, %89, %cst_48 {dimension_numbers = #tpu.dot_dimension_numbers<[1], [0], [0], [1], [0, 0, 1, 1], [], []>} : vector<8x4xbf16>, vector<4x64xbf16>, vector<8x64xf32> -> vector<8x64xf32>
    %91 = arith.addf %80, %90 : vector<8x64xf32>
    %c0_49 = arith.constant 0 : index
    %c32_50 = arith.constant 32 : index
    %c0_51 = arith.constant 0 : index
    %92 = vector.load %arg4[%c0_49, %c32_50, %c0_51] : memref<1x36x64xf32, #tpu.memory_space<vmem>>, vector<1x4x64xf32>
    %93 = vector.shape_cast %92 : vector<1x4x64xf32> to vector<4x64xf32>
    %c8_52 = arith.constant 8 : index
    %c0_53 = arith.constant 0 : index
    %94 = vector.load %arg2[%c8_52, %c0_53] : memref<9x64xf32, #tpu.memory_space<vmem>>, vector<1x64xf32>
    %95 = vector.broadcast %0 : f32 to vector<1x64xf32>
    %96 = arith.mulf %95, %94 : vector<1x64xf32>
    %97 = vector.broadcast %96 : vector<1x64xf32> to vector<4x64xf32>
    %98 = arith.addf %93, %97 : vector<4x64xf32>
    %c64 = arith.constant 64 : index
    %c0_54 = arith.constant 0 : index
    %99 = vector.load %arg6[%c64, %c0_54] : memref<72x4xbf16, #tpu.memory_space<vmem>>, vector<8x4xbf16>
    %100 = arith.truncf %98 : vector<4x64xf32> to vector<4x64xbf16>
    %cst_55 = arith.constant dense<0.000000e+00> : vector<8x64xf32>
    %101 = tpu.matmul %99, %100, %cst_55 {dimension_numbers = #tpu.dot_dimension_numbers<[1], [0], [0], [1], [0, 0, 1, 1], [], []>} : vector<8x4xbf16>, vector<4x64xbf16>, vector<8x64xf32> -> vector<8x64xf32>
    %102 = arith.addf %91, %101 : vector<8x64xf32>
    %103 = vector.broadcast %1 : f32 to vector<8x64xf32>
    %104 = arith.addf %102, %103 : vector<8x64xf32>
    %cst_56 = arith.constant 0.000000e+00 : f32
    %105 = vector.broadcast %cst_56 : f32 to vector<8x64xf32>
    %106 = arith.maximumf %104, %105 : vector<8x64xf32>
    %107 = vector.broadcast %2 : f32 to vector<8x64xf32>
    %108 = arith.addf %106, %107 : vector<8x64xf32>
    %c0_57 = arith.constant 0 : index
    %c0_58 = arith.constant 0 : index
    %109 = vector.load %arg8[%c0_57, %c0_58] : memref<8x4xbf16, #tpu.memory_space<vmem>>, vector<8x4xbf16>
    %c0_59 = arith.constant 0 : index
    %c0_60 = arith.constant 0 : index
    %c0_61 = arith.constant 0 : index
    %110 = vector.load %arg5[%c0_59, %c0_60, %c0_61] : memref<1x4x64xf32, #tpu.memory_space<vmem>>, vector<1x4x64xf32>
    %111 = vector.shape_cast %110 : vector<1x4x64xf32> to vector<4x64xf32>
    %cst_62 = arith.constant 0.000000e+00 : f32
    %112 = vector.broadcast %cst_62 : f32 to vector<4x64xf32>
    %113 = arith.maximumf %111, %112 : vector<4x64xf32>
    %114 = arith.truncf %113 : vector<4x64xf32> to vector<4x64xbf16>
    %cst_63 = arith.constant dense<0.000000e+00> : vector<8x64xf32>
    %115 = tpu.matmul %109, %114, %cst_63 {dimension_numbers = #tpu.dot_dimension_numbers<[1], [0], [0], [1], [0, 0, 1, 1], [], []>} : vector<8x4xbf16>, vector<4x64xbf16>, vector<8x64xf32> -> vector<8x64xf32>
    %c3_64 = arith.constant 3 : index
    %116 = memref.load %arg1[%c3_64] : memref<5xf32, #tpu.memory_space<smem>>
    %c4_65 = arith.constant 4 : index
    %117 = memref.load %arg1[%c4_65] : memref<5xf32, #tpu.memory_space<smem>>
    %cst_66 = arith.constant 0.000000e+00 : f32
    %118 = vector.broadcast %cst_66 : f32 to vector<8x128xf32>
    %c0_67 = arith.constant 0 : index
    %c0_68 = arith.constant 0 : index
    %119 = vector.load %arg10[%c0_67, %c0_68] : memref<8x320xf32, #tpu.memory_space<vmem>>, vector<8x128xf32>
    tpu.vector_store %arg10[%c0_67, %c0_68], %118 {strides = array<i32>} : memref<8x320xf32, #tpu.memory_space<vmem>>, vector<8x128xf32>,
    %c0_69 = arith.constant 0 : index
    %c192 = arith.constant 192 : index
    %120 = vector.load %arg10[%c0_69, %c192] : memref<8x320xf32, #tpu.memory_space<vmem>>, vector<8x128xf32>
    tpu.vector_store %arg10[%c0_69, %c192], %118 {strides = array<i32>} : memref<8x320xf32, #tpu.memory_space<vmem>>, vector<8x128xf32>,
    %c0_70 = arith.constant 0 : index
    %c128 = arith.constant 128 : index
    %121 = vector.load %arg10[%c0_70, %c128] : memref<8x320xf32, #tpu.memory_space<vmem>>, vector<8x64xf32>
    tpu.vector_store %arg10[%c0_70, %c128], %108 {strides = array<i32>} : memref<8x320xf32, #tpu.memory_space<vmem>>, vector<8x64xf32>,
    %cst_71 = arith.constant 0.000000e+00 : f32
    %122 = vector.broadcast %cst_71 : f32 to vector<8x64xf32>
    %c0_72 = arith.constant 0 : index
    %c119 = arith.constant 119 : index
    %123 = vector.load %arg10[%c0_72, %c119] : memref<8x320xf32, #tpu.memory_space<vmem>>, vector<8x64xf32>
    %c0_73 = arith.constant 0 : index
    %c0_74 = arith.constant 0 : index
    %124 = vector.load %arg3[%c0_73, %c0_74] : memref<9x64xf32, #tpu.memory_space<vmem>>, vector<1x64xf32>
    %125 = vector.broadcast %124 : vector<1x64xf32> to vector<8x64xf32>
    %126 = arith.mulf %123, %125 : vector<8x64xf32>
    %c0_75 = arith.constant 0 : index
    %c0_76 = arith.constant 0 : index
    %127 = vector.load %arg7[%c0_75, %c0_76] : memref<72x8xbf16, #tpu.memory_space<vmem>>, vector<8x8xbf16>
    %128 = arith.truncf %126 : vector<8x64xf32> to vector<8x64xbf16>
    %cst_77 = arith.constant dense<0.000000e+00> : vector<8x64xf32>
    %129 = tpu.matmul %127, %128, %cst_77 {dimension_numbers = #tpu.dot_dimension_numbers<[1], [0], [0], [1], [0, 0, 1, 1], [], []>} : vector<8x8xbf16>, vector<8x64xbf16>, vector<8x64xf32> -> vector<8x64xf32>
    %130 = arith.addf %122, %129 : vector<8x64xf32>
    %c0_78 = arith.constant 0 : index
    %c120 = arith.constant 120 : index
    %131 = vector.load %arg10[%c0_78, %c120] : memref<8x320xf32, #tpu.memory_space<vmem>>, vector<8x64xf32>
    %c1_79 = arith.constant 1 : index
    %c0_80 = arith.constant 0 : index
    %132 = vector.load %arg3[%c1_79, %c0_80] : memref<9x64xf32, #tpu.memory_space<vmem>>, vector<1x64xf32>
    %133 = vector.broadcast %132 : vector<1x64xf32> to vector<8x64xf32>
    %134 = arith.mulf %131, %133 : vector<8x64xf32>
    %c8_81 = arith.constant 8 : index
    %c0_82 = arith.constant 0 : index
    %135 = vector.load %arg7[%c8_81, %c0_82] : memref<72x8xbf16, #tpu.memory_space<vmem>>, vector<8x8xbf16>
    %136 = arith.truncf %134 : vector<8x64xf32> to vector<8x64xbf16>
    %cst_83 = arith.constant dense<0.000000e+00> : vector<8x64xf32>
    %137 = tpu.matmul %135, %136, %cst_83 {dimension_numbers = #tpu.dot_dimension_numbers<[1], [0], [0], [1], [0, 0, 1, 1], [], []>} : vector<8x8xbf16>, vector<8x64xbf16>, vector<8x64xf32> -> vector<8x64xf32>
    %138 = arith.addf %130, %137 : vector<8x64xf32>
    %c0_84 = arith.constant 0 : index
    %c121 = arith.constant 121 : index
    %139 = vector.load %arg10[%c0_84, %c121] : memref<8x320xf32, #tpu.memory_space<vmem>>, vector<8x64xf32>
    %c2_85 = arith.constant 2 : index
    %c0_86 = arith.constant 0 : index
    %140 = vector.load %arg3[%c2_85, %c0_86] : memref<9x64xf32, #tpu.memory_space<vmem>>, vector<1x64xf32>
    %141 = vector.broadcast %140 : vector<1x64xf32> to vector<8x64xf32>
    %142 = arith.mulf %139, %141 : vector<8x64xf32>
    %c16_87 = arith.constant 16 : index
    %c0_88 = arith.constant 0 : index
    %143 = vector.load %arg7[%c16_87, %c0_88] : memref<72x8xbf16, #tpu.memory_space<vmem>>, vector<8x8xbf16>
    %144 = arith.truncf %142 : vector<8x64xf32> to vector<8x64xbf16>
    %cst_89 = arith.constant dense<0.000000e+00> : vector<8x64xf32>
    %145 = tpu.matmul %143, %144, %cst_89 {dimension_numbers = #tpu.dot_dimension_numbers<[1], [0], [0], [1], [0, 0, 1, 1], [], []>} : vector<8x8xbf16>, vector<8x64xbf16>, vector<8x64xf32> -> vector<8x64xf32>
    %146 = arith.addf %138, %145 : vector<8x64xf32>
    %c0_90 = arith.constant 0 : index
    %c127 = arith.constant 127 : index
    %147 = vector.load %arg10[%c0_90, %c127] : memref<8x320xf32, #tpu.memory_space<vmem>>, vector<8x64xf32>
    %c3_91 = arith.constant 3 : index
    %c0_92 = arith.constant 0 : index
    %148 = vector.load %arg3[%c3_91, %c0_92] : memref<9x64xf32, #tpu.memory_space<vmem>>, vector<1x64xf32>
    %149 = vector.broadcast %148 : vector<1x64xf32> to vector<8x64xf32>
    %150 = arith.mulf %147, %149 : vector<8x64xf32>
    %c24_93 = arith.constant 24 : index
    %c0_94 = arith.constant 0 : index
    %151 = vector.load %arg7[%c24_93, %c0_94] : memref<72x8xbf16, #tpu.memory_space<vmem>>, vector<8x8xbf16>
    %152 = arith.truncf %150 : vector<8x64xf32> to vector<8x64xbf16>
    %cst_95 = arith.constant dense<0.000000e+00> : vector<8x64xf32>
    %153 = tpu.matmul %151, %152, %cst_95 {dimension_numbers = #tpu.dot_dimension_numbers<[1], [0], [0], [1], [0, 0, 1, 1], [], []>} : vector<8x8xbf16>, vector<8x64xbf16>, vector<8x64xf32> -> vector<8x64xf32>
    %154 = arith.addf %146, %153 : vector<8x64xf32>
    %c0_96 = arith.constant 0 : index
    %c128_97 = arith.constant 128 : index
    %155 = vector.load %arg10[%c0_96, %c128_97] : memref<8x320xf32, #tpu.memory_space<vmem>>, vector<8x64xf32>
    %c4_98 = arith.constant 4 : index
    %c0_99 = arith.constant 0 : index
    %156 = vector.load %arg3[%c4_98, %c0_99] : memref<9x64xf32, #tpu.memory_space<vmem>>, vector<1x64xf32>
    %157 = vector.broadcast %156 : vector<1x64xf32> to vector<8x64xf32>
    %158 = arith.mulf %155, %157 : vector<8x64xf32>
    %c32_100 = arith.constant 32 : index
    %c0_101 = arith.constant 0 : index
    %159 = vector.load %arg7[%c32_100, %c0_101] : memref<72x8xbf16, #tpu.memory_space<vmem>>, vector<8x8xbf16>
    %160 = arith.truncf %158 : vector<8x64xf32> to vector<8x64xbf16>
    %cst_102 = arith.constant dense<0.000000e+00> : vector<8x64xf32>
    %161 = tpu.matmul %159, %160, %cst_102 {dimension_numbers = #tpu.dot_dimension_numbers<[1], [0], [0], [1], [0, 0, 1, 1], [], []>} : vector<8x8xbf16>, vector<8x64xbf16>, vector<8x64xf32> -> vector<8x64xf32>
    %162 = arith.addf %154, %161 : vector<8x64xf32>
    %c0_103 = arith.constant 0 : index
    %c129 = arith.constant 129 : index
    %163 = vector.load %arg10[%c0_103, %c129] : memref<8x320xf32, #tpu.memory_space<vmem>>, vector<8x64xf32>
    %c5_104 = arith.constant 5 : index
    %c0_105 = arith.constant 0 : index
    %164 = vector.load %arg3[%c5_104, %c0_105] : memref<9x64xf32, #tpu.memory_space<vmem>>, vector<1x64xf32>
    %165 = vector.broadcast %164 : vector<1x64xf32> to vector<8x64xf32>
    %166 = arith.mulf %163, %165 : vector<8x64xf32>
    %c40_106 = arith.constant 40 : index
    %c0_107 = arith.constant 0 : index
    %167 = vector.load %arg7[%c40_106, %c0_107] : memref<72x8xbf16, #tpu.memory_space<vmem>>, vector<8x8xbf16>
    %168 = arith.truncf %166 : vector<8x64xf32> to vector<8x64xbf16>
    %cst_108 = arith.constant dense<0.000000e+00> : vector<8x64xf32>
    %169 = tpu.matmul %167, %168, %cst_108 {dimension_numbers = #tpu.dot_dimension_numbers<[1], [0], [0], [1], [0, 0, 1, 1], [], []>} : vector<8x8xbf16>, vector<8x64xbf16>, vector<8x64xf32> -> vector<8x64xf32>
    %170 = arith.addf %162, %169 : vector<8x64xf32>
    %c0_109 = arith.constant 0 : index
    %c135 = arith.constant 135 : index
    %171 = vector.load %arg10[%c0_109, %c135] : memref<8x320xf32, #tpu.memory_space<vmem>>, vector<8x64xf32>
    %c6_110 = arith.constant 6 : index
    %c0_111 = arith.constant 0 : index
    %172 = vector.load %arg3[%c6_110, %c0_111] : memref<9x64xf32, #tpu.memory_space<vmem>>, vector<1x64xf32>
    %173 = vector.broadcast %172 : vector<1x64xf32> to vector<8x64xf32>
    %174 = arith.mulf %171, %173 : vector<8x64xf32>
    %c48_112 = arith.constant 48 : index
    %c0_113 = arith.constant 0 : index
    %175 = vector.load %arg7[%c48_112, %c0_113] : memref<72x8xbf16, #tpu.memory_space<vmem>>, vector<8x8xbf16>
    %176 = arith.truncf %174 : vector<8x64xf32> to vector<8x64xbf16>
    %cst_114 = arith.constant dense<0.000000e+00> : vector<8x64xf32>
    %177 = tpu.matmul %175, %176, %cst_114 {dimension_numbers = #tpu.dot_dimension_numbers<[1], [0], [0], [1], [0, 0, 1, 1], [], []>} : vector<8x8xbf16>, vector<8x64xbf16>, vector<8x64xf32> -> vector<8x64xf32>
    %178 = arith.addf %170, %177 : vector<8x64xf32>
    %c0_115 = arith.constant 0 : index
    %c136 = arith.constant 136 : index
    %179 = vector.load %arg10[%c0_115, %c136] : memref<8x320xf32, #tpu.memory_space<vmem>>, vector<8x64xf32>
    %c7_116 = arith.constant 7 : index
    %c0_117 = arith.constant 0 : index
    %180 = vector.load %arg3[%c7_116, %c0_117] : memref<9x64xf32, #tpu.memory_space<vmem>>, vector<1x64xf32>
    %181 = vector.broadcast %180 : vector<1x64xf32> to vector<8x64xf32>
    %182 = arith.mulf %179, %181 : vector<8x64xf32>
    %c56_118 = arith.constant 56 : index
    %c0_119 = arith.constant 0 : index
    %183 = vector.load %arg7[%c56_118, %c0_119] : memref<72x8xbf16, #tpu.memory_space<vmem>>, vector<8x8xbf16>
    %184 = arith.truncf %182 : vector<8x64xf32> to vector<8x64xbf16>
    %cst_120 = arith.constant dense<0.000000e+00> : vector<8x64xf32>
    %185 = tpu.matmul %183, %184, %cst_120 {dimension_numbers = #tpu.dot_dimension_numbers<[1], [0], [0], [1], [0, 0, 1, 1], [], []>} : vector<8x8xbf16>, vector<8x64xbf16>, vector<8x64xf32> -> vector<8x64xf32>
    %186 = arith.addf %178, %185 : vector<8x64xf32>
    %c0_121 = arith.constant 0 : index
    %c137 = arith.constant 137 : index
    %187 = vector.load %arg10[%c0_121, %c137] : memref<8x320xf32, #tpu.memory_space<vmem>>, vector<8x64xf32>
    %c8_122 = arith.constant 8 : index
    %c0_123 = arith.constant 0 : index
    %188 = vector.load %arg3[%c8_122, %c0_123] : memref<9x64xf32, #tpu.memory_space<vmem>>, vector<1x64xf32>
    %189 = vector.broadcast %188 : vector<1x64xf32> to vector<8x64xf32>
    %190 = arith.mulf %187, %189 : vector<8x64xf32>
    %c64_124 = arith.constant 64 : index
    %c0_125 = arith.constant 0 : index
    %191 = vector.load %arg7[%c64_124, %c0_125] : memref<72x8xbf16, #tpu.memory_space<vmem>>, vector<8x8xbf16>
    %192 = arith.truncf %190 : vector<8x64xf32> to vector<8x64xbf16>
    %cst_126 = arith.constant dense<0.000000e+00> : vector<8x64xf32>
    %193 = tpu.matmul %191, %192, %cst_126 {dimension_numbers = #tpu.dot_dimension_numbers<[1], [0], [0], [1], [0, 0, 1, 1], [], []>} : vector<8x8xbf16>, vector<8x64xbf16>, vector<8x64xf32> -> vector<8x64xf32>
    %194 = arith.addf %186, %193 : vector<8x64xf32>
    %195 = vector.broadcast %117 : f32 to vector<8x64xf32>
    %196 = arith.mulf %195, %194 : vector<8x64xf32>
    %197 = vector.broadcast %116 : f32 to vector<8x64xf32>
    %198 = arith.addf %196, %197 : vector<8x64xf32>
    %199 = arith.addf %198, %115 : vector<8x64xf32>
    %c0_127 = arith.constant 0 : index
    %c0_128 = arith.constant 0 : index
    %c0_129 = arith.constant 0 : index
    %200 = vector.load %arg9[%c0_127, %c0_128, %c0_129] : memref<1x8x64xf32, #tpu.memory_space<vmem>>, vector<1x8x64xf32>
    %201 = vector.shape_cast %200 : vector<1x8x64xf32> to vector<8x64xf32>
    %202 = vector.shape_cast %199 : vector<8x64xf32> to vector<1x8x64xf32>
    tpu.vector_store %arg9[%c0_127, %c0_128, %c0_129], %202 {strides = array<i32>} : memref<1x8x64xf32, #tpu.memory_space<vmem>>, vector<1x8x64xf32>,
    return
  }
  func.func @transform_0(%arg0: i32) -> i32 {
    %c0_i32 = arith.constant 0 : i32
    %c0_i32_0 = arith.constant 0 : i32
    return %c0_i32 : i32
  }
  func.func @transform_1(%arg0: i32) -> (i32, i32) {
    %c0_i32 = arith.constant 0 : i32
    %c0_i32_0 = arith.constant 0 : i32
    %c0_i32_1 = arith.constant 0 : i32
    return %c0_i32, %c0_i32_0 : i32, i32
  }
  func.func @transform_2(%arg0: i32) -> (i32, i32) {
    %c0_i32 = arith.constant 0 : i32
    %c0_i32_0 = arith.constant 0 : i32
    %c0_i32_1 = arith.constant 0 : i32
    return %c0_i32, %c0_i32_0 : i32, i32
  }
  func.func @transform_3(%arg0: i32) -> (i32, i32, i32) {
    %c0_i32 = arith.constant 0 : i32
    %c0_i32_0 = arith.constant 0 : i32
    %c0_i32_1 = arith.constant 0 : i32
    return %arg0, %c0_i32, %c0_i32_0 : i32, i32, i32
  }
  func.func @transform_4(%arg0: i32) -> (i32, i32, i32) {
    %c0_i32 = arith.constant 0 : i32
    %c0_i32_0 = arith.constant 0 : i32
    %c0_i32_1 = arith.constant 0 : i32
    return %arg0, %c0_i32, %c0_i32_0 : i32, i32, i32
  }
  func.func @transform_5(%arg0: i32) -> (i32, i32) {
    %c0_i32 = arith.constant 0 : i32
    %c0_i32_0 = arith.constant 0 : i32
    %c0_i32_1 = arith.constant 0 : i32
    return %c0_i32, %c0_i32_0 : i32, i32
  }
  func.func @transform_6(%arg0: i32) -> (i32, i32) {
    %c0_i32 = arith.constant 0 : i32
    %c0_i32_0 = arith.constant 0 : i32
    %c0_i32_1 = arith.constant 0 : i32
    return %c0_i32, %c0_i32_0 : i32, i32
  }
  func.func @transform_7(%arg0: i32) -> (i32, i32) {
    %c0_i32 = arith.constant 0 : i32
    %c0_i32_0 = arith.constant 0 : i32
    %c0_i32_1 = arith.constant 0 : i32
    return %c0_i32, %c0_i32_0 : i32, i32
  }
  func.func @transform_8(%arg0: i32) -> (i32, i32, i32) {
    %c0_i32 = arith.constant 0 : i32
    %c0_i32_0 = arith.constant 0 : i32
    %c0_i32_1 = arith.constant 0 : i32
    return %arg0, %c0_i32, %c0_i32_0 : i32, i32, i32
  }
}

</mosaic_0001>

<llo_original>
// kernel: basic_block_forward.1
$region0: #{basic_block_forward.1}
  #allocation0 [shape = 'u32[]', space=smem, size = 0x4, offset = 0x4, fixed_abs, tag = 'smem constant byte address 0x4 - core index']
  #allocation1 [shape = 'u32[144,128]{1,0:T(1,128)}', space=vmem, size = 0x12000, scoped, tag = 'internal scratch']
  #allocation2 [shape = 'f32[8,320]{1,0:T(8,128)}', space=vmem, size = 0x3000, scoped, tag = 'scratch operand']
  %s0 = inlined_call_operand.vmem [shape: f32[5], index: 0, kind: input, shape index: {}]
  %s1 = inlined_call_operand.vmem [shape: f32[9,64], index: 1, kind: input, shape index: {}]
  %s2 = inlined_call_operand.vmem [shape: f32[9,64], index: 2, kind: input, shape index: {}]
  %s3 = inlined_call_operand.vmem [shape: f32[2,36,64], index: 3, kind: input, shape index: {}]
  %s4 = inlined_call_operand.vmem [shape: f32[2,4,64], index: 4, kind: input, shape index: {}]
  %s5 = inlined_call_operand.vmem [shape: bf16[72,4], index: 5, kind: input, shape index: {}]
  %s6 = inlined_call_operand.vmem [shape: bf16[72,8], index: 6, kind: input, shape index: {}]
  %s7 = inlined_call_operand.vmem [shape: bf16[8,4], index: 7, kind: input, shape index: {}]
  %s8 = inlined_call_operand.vmem [shape: f32[2,8,64], index: 8, kind: output, shape index: {}]
  %s9 = sld [smem:[#allocation0]]
  $region69: #{basic_block_forward.1} parent=0
    _
  %s11 = ssub.s32 1, %s9
  %s12 = scalar_select 0, %s11, %s9
  $region1: #{basic_block_forward.1} parent=0
    #allocation3 [shape = 'u8[512]{0}', space=smem, size = 0x200, scoped, tag = 'input window, operand 0, single buffered']
    #allocation4 [shape = 's32[2]{0}', space=sflag, size = 0x8, scoped, tag = 'scoped memory for basic_block_forward.1']
    %13 = vsyncpa [#allocation4], 0
    loop: start=0, step=1, limit=4
    $region2: #{basic_block_forward.1} parent=1 // loop_pre_header
      _
    $region3: #{basic_block_forward.1} parent=1 // loop_header
      %s15 = sphi 0, %s19
      %p16 = scmp.ge.s32.totalorder %s15, 4
      %s23 = sphi 0, %s23
      %s25 = sphi 0, %s23
      %s26 = sphi 0, %s25
      %s40 = sphi 0, %s26
      %s44 = sphi 0, %s44
      %s46 = sphi 0, %s44
      %s47 = sphi 0, %s46
      %s61 = sphi 0, %s47
      %s65 = sphi 0, %s65
      %s67 = sphi 0, %s65
      %s68 = sphi 0, %s67
      %s82 = sphi 0, %s68
      %s88 = sphi 0, %s90
      %s91 = sphi 0, %s88
      %s92 = sphi 0, %s91
      %s108 = sphi 0, %s92
      %s114 = sphi 0, %s116
      %s117 = sphi 0, %s114
      %s118 = sphi 0, %s117
      %s134 = sphi 0, %s118
      %s138 = sphi 0, %s138
      %s140 = sphi 0, %s138
      %s141 = sphi 0, %s140
      %s155 = sphi 0, %s141
      %s159 = sphi 0, %s159
      %s161 = sphi 0, %s159
      %s162 = sphi 0, %s161
      %s176 = sphi 0, %s162
      %s180 = sphi 0, %s180
      %s182 = sphi 0, %s180
      %s183 = sphi 0, %s182
      %s197 = sphi 0, %s183
      %s203 = sphi 0, %s205
      %s206 = sphi 0, %s203
      %s207 = sphi 0, %s206
      %s223 = sphi 0, %s207
    $region4: #{basic_block_forward.1} parent=1 // loop_header_branch
      %18 = sbr.rel (%p16) target = $region8
    $region5: #{basic_block_forward.1} parent=1 // loop_body
      %s20 = ssub.s32 %s15, 1
      %s21 = ssub.s32 %s15, 2
      %s22 = sadd.s32 %s15, 1
      %s24 = sadd.s32 %s23, 1
      %p27 = scmp.eq.s32.totalorder %s15, 1
      %p28 = scmp.ne.s32.totalorder %s23, %s25
      %p29 = scmp.eq.s32.totalorder %s15, 0
      %p30 = por %p28, %p29
      %p31 = scmp.ne.s32.totalorder %s23, %s25
      %p32 = scmp.eq.s32.totalorder %s20, 1
      %p33 = por %p31, %p32
      %p34 = scmp.ne.s32.totalorder %s25, %s26
      %p35 = scmp.eq.s32.totalorder %s20, 0
      %p36 = por %p34, %p35
      %p37 = scmp.ne.s32.totalorder %s25, %s26
      %p38 = scmp.eq.s32.totalorder %s21, 1
      %p39 = por %p37, %p38
      %p41 = scmp.ne.s32.totalorder %s26, %s40
      %p42 = scmp.eq.s32.totalorder %s21, 0
      %p43 = por %p41, %p42
      %s45 = sadd.s32 %s44, 1
      %p48 = scmp.eq.s32.totalorder %s15, 1
      %p49 = scmp.ne.s32.totalorder %s44, %s46
      %p50 = scmp.eq.s32.totalorder %s15, 0
      %p51 = por %p49, %p50
      %p52 = scmp.ne.s32.totalorder %s44, %s46
      %p53 = scmp.eq.s32.totalorder %s20, 1
      %p54 = por %p52, %p53
      %p55 = scmp.ne.s32.totalorder %s46, %s47
      %p56 = scmp.eq.s32.totalorder %s20, 0
      %p57 = por %p55, %p56
      %p58 = scmp.ne.s32.totalorder %s46, %s47
      %p59 = scmp.eq.s32.totalorder %s21, 1
      %p60 = por %p58, %p59
      %p62 = scmp.ne.s32.totalorder %s47, %s61
      %p63 = scmp.eq.s32.totalorder %s21, 0
      %p64 = por %p62, %p63
      %s66 = sadd.s32 %s65, 1
      %p69 = scmp.eq.s32.totalorder %s15, 1
      %p70 = scmp.ne.s32.totalorder %s65, %s67
      %p71 = scmp.eq.s32.totalorder %s15, 0
      %p72 = por %p70, %p71
      %p73 = scmp.ne.s32.totalorder %s65, %s67
      %p74 = scmp.eq.s32.totalorder %s20, 1
      %p75 = por %p73, %p74
      %p76 = scmp.ne.s32.totalorder %s67, %s68
      %p77 = scmp.eq.s32.totalorder %s20, 0
      %p78 = por %p76, %p77
      %p79 = scmp.ne.s32.totalorder %s67, %s68
      %p80 = scmp.eq.s32.totalorder %s21, 1
      %p81 = por %p79, %p80
      %p83 = scmp.ne.s32.totalorder %s68, %s82
      %p84 = scmp.eq.s32.totalorder %s21, 0
      %p85 = por %p83, %p84
      %s86 = ssub.s32 %s15, %s22
      %p87 = scmp.eq.s32.totalorder %s86, 0
      %s89 = sadd.s32 %s88, 1
      %s90 = scalar_select %p87, %s88, %s89
      %p93 = pneg %p87
      %p94 = scmp.eq.s32.totalorder %s15, 1
      %p95 = por %p93, %p94
      %p96 = scmp.ne.s32.totalorder %s88, %s91
      %p97 = scmp.eq.s32.totalorder %s15, 0
      %p98 = por %p96, %p97
      %p99 = scmp.ne.s32.totalorder %s88, %s91
      %p100 = scmp.eq.s32.totalorder %s20, 1
      %p101 = por %p99, %p100
      %p102 = scmp.ne.s32.totalorder %s91, %s92
      %p103 = scmp.eq.s32.totalorder %s20, 0
      %p104 = por %p102, %p103
      %p105 = scmp.ne.s32.totalorder %s91, %s92
      %p106 = scmp.eq.s32.totalorder %s21, 1
      %p107 = por %p105, %p106
      %p109 = scmp.ne.s32.totalorder %s92, %s108
      %p110 = scmp.eq.s32.totalorder %s21, 0
      %p111 = por %p109, %p110
      %s112 = ssub.s32 %s15, %s22
      %p113 = scmp.eq.s32.totalorder %s112, 0
      %s115 = sadd.s32 %s114, 1
      %s116 = scalar_select %p113, %s114, %s115
      %p119 = pneg %p113
      %p120 = scmp.eq.s32.totalorder %s15, 1
      %p121 = por %p119, %p120
      %p122 = scmp.ne.s32.totalorder %s114, %s117
      %p123 = scmp.eq.s32.totalorder %s15, 0
      %p124 = por %p122, %p123
      %p125 = scmp.ne.s32.totalorder %s114, %s117
      %p126 = scmp.eq.s32.totalorder %s20, 1
      %p127 = por %p125, %p126
      %p128 = scmp.ne.s32.totalorder %s117, %s118
      %p129 = scmp.eq.s32.totalorder %s20, 0
      %p130 = por %p128, %p129
      %p131 = scmp.ne.s32.totalorder %s117, %s118
      %p132 = scmp.eq.s32.totalorder %s21, 1
      %p133 = por %p131, %p132
      %p135 = scmp.ne.s32.totalorder %s118, %s134
      %p136 = scmp.eq.s32.totalorder %s21, 0
      %p137 = por %p135, %p136
      %s139 = sadd.s32 %s138, 1
      %p142 = scmp.eq.s32.totalorder %s15, 1
      %p143 = scmp.ne.s32.totalorder %s138, %s140
      %p144 = scmp.eq.s32.totalorder %s15, 0
      %p145 = por %p143, %p144
      %p146 = scmp.ne.s32.totalorder %s138, %s140
      %p147 = scmp.eq.s32.totalorder %s20, 1
      %p148 = por %p146, %p147
      %p149 = scmp.ne.s32.totalorder %s140, %s141
      %p150 = scmp.eq.s32.totalorder %s20, 0
      %p151 = por %p149, %p150
      %p152 = scmp.ne.s32.totalorder %s140, %s141
      %p153 = scmp.eq.s32.totalorder %s21, 1
      %p154 = por %p152, %p153
      %p156 = scmp.ne.s32.totalorder %s141, %s155
      %p157 = scmp.eq.s32.totalorder %s21, 0
      %p158 = por %p156, %p157
      %s160 = sadd.s32 %s159, 1
      %p163 = scmp.eq.s32.totalorder %s15, 1
      %p164 = scmp.ne.s32.totalorder %s159, %s161
      %p165 = scmp.eq.s32.totalorder %s15, 0
      %p166 = por %p164, %p165
      %p167 = scmp.ne.s32.totalorder %s159, %s161
      %p168 = scmp.eq.s32.totalorder %s20, 1
      %p169 = por %p167, %p168
      %p170 = scmp.ne.s32.totalorder %s161, %s162
      %p171 = scmp.eq.s32.totalorder %s20, 0
      %p172 = por %p170, %p171
      %p173 = scmp.ne.s32.totalorder %s161, %s162
      %p174 = scmp.eq.s32.totalorder %s21, 1
      %p175 = por %p173, %p174
      %p177 = scmp.ne.s32.totalorder %s162, %s176
      %p178 = scmp.eq.s32.totalorder %s21, 0
      %p179 = por %p177, %p178
      %s181 = sadd.s32 %s180, 1
      %p184 = scmp.eq.s32.totalorder %s15, 1
      %p185 = scmp.ne.s32.totalorder %s180, %s182
      %p186 = scmp.eq.s32.totalorder %s15, 0
      %p187 = por %p185, %p186
      %p188 = scmp.ne.s32.totalorder %s180, %s182
      %p189 = scmp.eq.s32.totalorder %s20, 1
      %p190 = por %p188, %p189
      %p191 = scmp.ne.s32.totalorder %s182, %s183
      %p192 = scmp.eq.s32.totalorder %s20, 0
      %p193 = por %p191, %p192
      %p194 = scmp.ne.s32.totalorder %s182, %s183
      %p195 = scmp.eq.s32.totalorder %s21, 1
      %p196 = por %p194, %p195
      %p198 = scmp.ne.s32.totalorder %s183, %s197
      %p199 = scmp.eq.s32.totalorder %s21, 0
      %p200 = por %p198, %p199
      %s201 = ssub.s32 %s15, %s22
      %p202 = scmp.eq.s32.totalorder %s201, 0
      %s204 = sadd.s32 %s203, 1
      %s205 = scalar_select %p202, %s203, %s204
      %p208 = pneg %p202
      %p209 = scmp.eq.s32.totalorder %s15, 1
      %p210 = por %p208, %p209
      %p211 = scmp.ne.s32.totalorder %s203, %s206
      %p212 = scmp.eq.s32.totalorder %s15, 0
      %p213 = por %p211, %p212
      %p214 = scmp.ne.s32.totalorder %s203, %s206
      %p215 = scmp.eq.s32.totalorder %s20, 1
      %p216 = por %p214, %p215
      %p217 = scmp.ne.s32.totalorder %s206, %s207
      %p218 = scmp.eq.s32.totalorder %s20, 0
      %p219 = por %p217, %p218
      %p220 = scmp.ne.s32.totalorder %s206, %s207
      %p221 = scmp.eq.s32.totalorder %s21, 1
      %p222 = por %p220, %p221
      %p224 = scmp.ne.s32.totalorder %s207, %s223
      %p225 = scmp.eq.s32.totalorder %s21, 0
      %p226 = por %p224, %p225
      %p227 = scmp.le.s32.totalorder 1, %s15
      %p228 = scmp.lt.s32.totalorder %s15, 3
      %p229 = pnand %p227, %p228
      %p230 = pneg %p229
      // Predicated region
      $region9: #{basic_block_forward.1} parent=5 // pred_check
        _
      $region10: #{basic_block_forward.1} parent=5 // pred_check_branch
        %232 = sbr.rel (%p229) target = $region12
      $region11: #{basic_block_forward.1} parent=5 // pred_region
        %s233 = ssub.s32 %s15, 1
        // Predicated region
        $region13: #{basic_block_forward.1} parent=11 // pred_check
          %p234 = pneg %p36
        $region14: #{basic_block_forward.1} parent=11 // pred_check_branch
          %236 = sbr.rel (%p234) target = $region16
        $region15: #{basic_block_forward.1} parent=11 // pred_region
          %s238 = ssub.s32 16, 16
          %239 = vsyncadd [#allocation4], %s238
          %s241 = sshll.u32 %s0, 4
          %s242 = int_to_ptr.vmem [resolvable:$true] %s241
          %244 = dma.vmem_to_smem %s242, 16, [#allocation3], [#allocation4]
        $region16: #{basic_block_forward.1} parent=11 // pred_fallthru
          _
        // Predicated region
        $region17: #{basic_block_forward.1} parent=11 // pred_check
          %p245 = pneg %p57
        $region18: #{basic_block_forward.1} parent=11 // pred_check_branch
          %247 = sbr.rel (%p245) target = $region20
        $region19: #{basic_block_forward.1} parent=11 // pred_region
          _
        $region20: #{basic_block_forward.1} parent=11 // pred_fallthru
          _
        // Predicated region
        $region21: #{basic_block_forward.1} parent=11 // pred_check
          %p248 = pneg %p78
        $region22: #{basic_block_forward.1} parent=11 // pred_check_branch
          %250 = sbr.rel (%p248) target = $region24
        $region23: #{basic_block_forward.1} parent=11 // pred_region
          _
        $region24: #{basic_block_forward.1} parent=11 // pred_fallthru
          _
        // Predicated region
        $region25: #{basic_block_forward.1} parent=11 // pred_check
          %p251 = pneg %p151
        $region26: #{basic_block_forward.1} parent=11 // pred_check_branch
          %253 = sbr.rel (%p251) target = $region28
        $region27: #{basic_block_forward.1} parent=11 // pred_region
          _
        $region28: #{basic_block_forward.1} parent=11 // pred_fallthru
          _
        // Predicated region
        $region29: #{basic_block_forward.1} parent=11 // pred_check
          %p254 = pneg %p172
        $region30: #{basic_block_forward.1} parent=11 // pred_check_branch
          %256 = sbr.rel (%p254) target = $region32
        $region31: #{basic_block_forward.1} parent=11 // pred_region
          _
        $region32: #{basic_block_forward.1} parent=11 // pred_fallthru
          _
        // Predicated region
        $region33: #{basic_block_forward.1} parent=11 // pred_check
          %p257 = pneg %p193
        $region34: #{basic_block_forward.1} parent=11 // pred_check_branch
          %259 = sbr.rel (%p257) target = $region36
        $region35: #{basic_block_forward.1} parent=11 // pred_region
          _
        $region36: #{basic_block_forward.1} parent=11 // pred_fallthru
          _
      $region12: #{basic_block_forward.1} parent=5 // pred_fallthru
        _
      %p260 = scmp.lt.s32.totalorder %s15, 2
      // Predicated region
      $region37: #{basic_block_forward.1} parent=5 // pred_check
        %p261 = pneg %p260
      $region38: #{basic_block_forward.1} parent=5 // pred_check_branch
        %263 = sbr.rel (%p261) target = $region40
      $region39: #{basic_block_forward.1} parent=5 // pred_region
        // Predicated region
        $region41: #{basic_block_forward.1} parent=39 // pred_check
          %p264 = pneg %p98
        $region42: #{basic_block_forward.1} parent=39 // pred_check_branch
          %266 = sbr.rel (%p264) target = $region44
        $region43: #{basic_block_forward.1} parent=39 // pred_region
          %p267 = scmp.lt.s32.totalorder %s15, 1
          %s268 = scalar_select %p267, %s15, 1
          %s269 = smul.addr %s268, 5
          %s270 = smul.addr %s269, 8
          %s271 = scalar_lea.vmem %s3, %s270
        $region44: #{basic_block_forward.1} parent=39 // pred_fallthru
          _
        // Predicated region
        $region45: #{basic_block_forward.1} parent=39 // pred_check
          %p272 = pneg %p124
        $region46: #{basic_block_forward.1} parent=39 // pred_check_branch
          %274 = sbr.rel (%p272) target = $region48
        $region47: #{basic_block_forward.1} parent=39 // pred_region
          %p275 = scmp.lt.s32.totalorder %s15, 1
          %s276 = scalar_select %p275, %s15, 1
          %s277 = smul.addr %s276, 4
          %s278 = scalar_lea.vmem %s4, %s277
        $region48: #{basic_block_forward.1} parent=39 // pred_fallthru
          _
      $region40: #{basic_block_forward.1} parent=5 // pred_fallthru
        _
      %p279 = scmp.le.s32.totalorder 1, %s15
      %p280 = scmp.lt.s32.totalorder %s15, 3
      %p281 = pnand %p279, %p280
      %p282 = pneg %p281
      // Predicated region
      $region49: #{basic_block_forward.1} parent=5 // pred_check
        _
      $region50: #{basic_block_forward.1} parent=5 // pred_check_branch
        %284 = sbr.rel (%p281) target = $region52
      $region51: #{basic_block_forward.1} parent=5 // pred_region
        %s285 = ssub.s32 %s15, 1
        // Predicated region
        $region53: #{basic_block_forward.1} parent=51 // pred_check
          %p286 = pneg %p36
        $region54: #{basic_block_forward.1} parent=51 // pred_check_branch
          %288 = sbr.rel (%p286) target = $region56
        $region55: #{basic_block_forward.1} parent=51 // pred_region
          %289 = dma.done [#allocation4], 16
        $region56: #{basic_block_forward.1} parent=51 // pred_fallthru
          _
        %290 = sfence
        %p291 = pneg %p36
        %p292 = pneg %p33
        %p293 = pneg %p57
        %p294 = pneg %p54
        %p295 = pneg %p78
        %p296 = pneg %p75
        %p297 = scmp.lt.s32.totalorder %s20, 1
        %s298 = scalar_select %p297, %s20, 1
        %s299 = smul.addr %s298, 5
        %s300 = smul.addr %s299, 8
        %s301 = scalar_lea.vmem %s3, %s300
        %p302 = pneg %p104
        %p303 = pneg %p101
        %p304 = scmp.lt.s32.totalorder %s20, 1
        %s305 = scalar_select %p304, %s20, 1
        %s306 = smul.addr %s305, 4
        %s307 = scalar_lea.vmem %s4, %s306
        %p308 = pneg %p130
        %p309 = pneg %p127
        %p310 = pneg %p151
        %p311 = pneg %p148
        %p312 = pneg %p172
        %p313 = pneg %p169
        %p314 = pneg %p193
        %p315 = pneg %p190
        %p316 = pneg %p219
        %p317 = pneg %p216
        %p318 = scmp.lt.s32.totalorder %s20, 1
        %s319 = scalar_select %p318, %s20, 1
        %s320 = smul.addr %s319, 8
        %s321 = scalar_lea.vmem %s8, %s320
        %p322 = scmp.lt.s32.totalorder %s20, 1
        %s323 = scalar_select %p322, %s20, 1
        %s324 = smul.addr %s323, 5
        %s325 = smul.addr %s324, 8
        %s326 = scalar_lea.vmem %s3, %s325
        %p327 = scmp.lt.s32.totalorder %s20, 1
        %s328 = scalar_select %p327, %s20, 1
        %s329 = smul.addr %s328, 4
        %s330 = scalar_lea.vmem %s4, %s329
        %p331 = scmp.lt.s32.totalorder %s20, 1
        %s332 = scalar_select %p331, %s20, 1
        %s333 = smul.addr %s332, 8
        %s334 = scalar_lea.vmem %s8, %s333
        %s336 = sld [smem:[#allocation3]]
        %s337 = sld [smem:[#allocation3 + $0x1]]
        %s338 = sld [smem:[#allocation3 + $0x2]]
        %v339 = vld [vmem:[%s326] sm:$0xf]
        %v340 = vld [vmem:[%s1] sm:$0x1]
        %v341 = vstv %s336
        %v342 = vmul.f32 %v341, %v340
        %v343 = vlaneseq
        %v344 = vshrl.u32 %v343, 7
        %v345 = vsub.s32 0, %v344
        %v346 = vrot.slane %v342, %v345
        %v347 = vadd.f32 %v339, %v346
        %v348 = vld [vmem:[%s5] sm:$0xf]
        %v349 = vpack.c.bf16 %v347, %v347
        %v350 = vld [vmem:[%s326 + $0x4] sm:$0xf]
        %v351 = vld [vmem:[%s1 + $0x1] sm:$0x1]
        %v352 = vmul.f32 %v341, %v351
        %v353 = vlaneseq
        %v354 = vshrl.u32 %v353, 7
        %v355 = vsub.s32 0, %v354
        %v356 = vrot.slane %v352, %v355
        %v357 = vadd.f32 %v350, %v356
        %v358 = vld [vmem:[%s5 + $0x4] sm:$0xf]
        %v359 = vpack.c.bf16 %v357, %v357
        %vm360 = vcmask 31744
        %v362 = vsel %vm360, %v358, 0
        %vm364 = vcmask 1041408
        %v366 = vsel %vm364, %v359, 0
        %368 = vmatprep.subr.bf16.mxu0 0
        %369 = vmatpush1.bf16.msra.mxu0 0
        %370 = vmatprep.subr.bf16.mxu0 0
        %371 = vmatpush1.bf16.msra.mxu0 0
        %372 = vmatprep.subr.bf16.mxu0 0
        %373 = vmatpush1.bf16.msra.mxu0 0
        %374 = vmatprep.subr.bf16.mxu0 0
        %375 = vmatpush1.bf16.msra.mxu0 0
        %376 = vmatprep.subr.bf16.mxu0 0
        %377 = vmatpush1.bf16.msra.mxu0 0
        %378 = vmatprep.subr.bf16.mxu0 0
        %379 = vmatpush1.bf16.msra.mxu0 0
        %380 = vmatprep.subr.bf16.mxu0 0
        %381 = vmatpush1.bf16.msra.mxu0 0
        %382 = vmatprep.subr.bf16.mxu0 0
        %383 = vmatpush1.bf16.msra.mxu0 %v366
        %384 = vmatprep.subr.bf16.mxu0 0
        %385 = vmatpush2.bf16.msra.mxu0 0
        %386 = vmatprep.subr.bf16.mxu0 0
        %387 = vmatpush2.bf16.msra.mxu0 0
        %388 = vmatprep.subr.bf16.mxu0 0
        %389 = vmatpush2.bf16.msra.mxu0 0
        %390 = vmatprep.subr.bf16.mxu0 0
        %391 = vmatpush2.bf16.msra.mxu0 0
        %392 = vmatprep.subr.bf16.mxu0 0
        %393 = vmatpush2.bf16.msra.mxu0 0
        %394 = vmatprep.subr.bf16.mxu0 0
        %395 = vmatpush2.bf16.msra.mxu0 0
        %396 = vmatprep.subr.bf16.mxu0 0
        %397 = vmatpush2.bf16.msra.mxu0 0
        %398 = vmatprep.subr.bf16.mxu0 0
        %399 = vmatpush2.bf16.msra.mxu0 0
        %400 = vmatprep.mubr.bf16.mxu0 0
        %401 = vmatmul.mubr.bf16.gmra.mxu0 %v362
        %v402 = vpop.f32.mrf.mxu0
        %v403 = vadd.f32 0.0, %v402
        %v404 = vpop.f32.mrf.mxu0
        %v405 = vpop.f32.mrf.mxu0
        %v406 = vpop.f32.mrf.mxu0
        %407 = vdwg.mxu0
        %v409 = vsel %vm360, %v348, 0
        %v412 = vsel %vm364, %v349, 0
        %414 = vmatprep.subr.bf16.mxu0 0
        %415 = vmatpush1.bf16.msra.mxu0 0
        %416 = vmatprep.subr.bf16.mxu0 0
        %417 = vmatpush1.bf16.msra.mxu0 0
        %418 = vmatprep.subr.bf16.mxu0 0
        %419 = vmatpush1.bf16.msra.mxu0 0
        %420 = vmatprep.subr.bf16.mxu0 0
        %421 = vmatpush1.bf16.msra.mxu0 0
        %422 = vmatprep.subr.bf16.mxu0 0
        %423 = vmatpush1.bf16.msra.mxu0 0
        %424 = vmatprep.subr.bf16.mxu0 0
        %425 = vmatpush1.bf16.msra.mxu0 0
        %426 = vmatprep.subr.bf16.mxu0 0
        %427 = vmatpush1.bf16.msra.mxu0 0
        %428 = vmatprep.subr.bf16.mxu0 0
        %429 = vmatpush1.bf16.msra.mxu0 %v412
        %430 = vmatprep.subr.bf16.mxu0 0
        %431 = vmatpush2.bf16.msra.mxu0 0
        %432 = vmatprep.subr.bf16.mxu0 0
        %433 = vmatpush2.bf16.msra.mxu0 0
        %434 = vmatprep.subr.bf16.mxu0 0
        %435 = vmatpush2.bf16.msra.mxu0 0
        %436 = vmatprep.subr.bf16.mxu0 0
        %437 = vmatpush2.bf16.msra.mxu0 0
        %438 = vmatprep.subr.bf16.mxu0 0
        %439 = vmatpush2.bf16.msra.mxu0 0
        %440 = vmatprep.subr.bf16.mxu0 0
        %441 = vmatpush2.bf16.msra.mxu0 0
        %442 = vmatprep.subr.bf16.mxu0 0
        %443 = vmatpush2.bf16.msra.mxu0 0
        %444 = vmatprep.subr.bf16.mxu0 0
        %445 = vmatpush2.bf16.msra.mxu0 0
        %446 = vmatprep.mubr.bf16.mxu0 0
        %447 = vmatmul.mubr.bf16.gmra.mxu0 %v409
        %v448 = vpop.f32.mrf.mxu0
        %v449 = vadd.f32 %v403, %v448
        %v450 = vpop.f32.mrf.mxu0
        %v451 = vpop.f32.mrf.mxu0
        %v452 = vpop.f32.mrf.mxu0
        %453 = vdwg.mxu0
        %v454 = vld [vmem:[%s326 + $0x8] sm:$0xf]
        %v455 = vld [vmem:[%s1 + $0x2] sm:$0x1]
        %v456 = vmul.f32 %v341, %v455
        %v457 = vlaneseq
        %v458 = vshrl.u32 %v457, 7
        %v459 = vsub.s32 0, %v458
        %v460 = vrot.slane %v456, %v459
        %v461 = vadd.f32 %v454, %v460
        %v462 = vld [vmem:[%s5 + $0x8] sm:$0xf]
        %v463 = vpack.c.bf16 %v461, %v461
        %v465 = vsel %vm360, %v462, 0
        %v468 = vsel %vm364, %v463, 0
        %470 = vmatprep.subr.bf16.mxu0 0
        %471 = vmatpush1.bf16.msra.mxu0 0
        %472 = vmatprep.subr.bf16.mxu0 0
        %473 = vmatpush1.bf16.msra.mxu0 0
        %474 = vmatprep.subr.bf16.mxu0 0
        %475 = vmatpush1.bf16.msra.mxu0 0
        %476 = vmatprep.subr.bf16.mxu0 0
        %477 = vmatpush1.bf16.msra.mxu0 0
        %478 = vmatprep.subr.bf16.mxu0 0
        %479 = vmatpush1.bf16.msra.mxu0 0
        %480 = vmatprep.subr.bf16.mxu0 0
        %481 = vmatpush1.bf16.msra.mxu0 0
        %482 = vmatprep.subr.bf16.mxu0 0
        %483 = vmatpush1.bf16.msra.mxu0 0
        %484 = vmatprep.subr.bf16.mxu0 0
        %485 = vmatpush1.bf16.msra.mxu0 %v468
        %486 = vmatprep.subr.bf16.mxu0 0
        %487 = vmatpush2.bf16.msra.mxu0 0
        %488 = vmatprep.subr.bf16.mxu0 0
        %489 = vmatpush2.bf16.msra.mxu0 0
        %490 = vmatprep.subr.bf16.mxu0 0
        %491 = vmatpush2.bf16.msra.mxu0 0
        %492 = vmatprep.subr.bf16.mxu0 0
        %493 = vmatpush2.bf16.msra.mxu0 0
        %494 = vmatprep.subr.bf16.mxu0 0
        %495 = vmatpush2.bf16.msra.mxu0 0
        %496 = vmatprep.subr.bf16.mxu0 0
        %497 = vmatpush2.bf16.msra.mxu0 0
        %498 = vmatprep.subr.bf16.mxu0 0
        %499 = vmatpush2.bf16.msra.mxu0 0
        %500 = vmatprep.subr.bf16.mxu0 0
        %501 = vmatpush2.bf16.msra.mxu0 0
        %502 = vmatprep.mubr.bf16.mxu0 0
        %503 = vmatmul.mubr.bf16.gmra.mxu0 %v465
        %v504 = vpop.f32.mrf.mxu0
        %v505 = vadd.f32 0.0, %v504
        %v506 = vpop.f32.mrf.mxu0
        %v507 = vpop.f32.mrf.mxu0
        %v508 = vpop.f32.mrf.mxu0
        %509 = vdwg.mxu0
        %v510 = vadd.f32 %v449, %v505
        %v511 = vld [vmem:[%s326 + $0xc] sm:$0xf]
        %v512 = vld [vmem:[%s1 + $0x3] sm:$0x1]
        %v513 = vmul.f32 %v341, %v512
        %v514 = vlaneseq
        %v515 = vshrl.u32 %v514, 7
        %v516 = vsub.s32 0, %v515
        %v517 = vrot.slane %v513, %v516
        %v518 = vadd.f32 %v511, %v517
        %v519 = vld [vmem:[%s5 + $0xc] sm:$0xf]
        %v520 = vpack.c.bf16 %v518, %v518
        %v522 = vsel %vm360, %v519, 0
        %v525 = vsel %vm364, %v520, 0
        %527 = vmatprep.subr.bf16.mxu0 0
        %528 = vmatpush1.bf16.msra.mxu0 0
        %529 = vmatprep.subr.bf16.mxu0 0
        %530 = vmatpush1.bf16.msra.mxu0 0
        %531 = vmatprep.subr.bf16.mxu0 0
        %532 = vmatpush1.bf16.msra.mxu0 0
        %533 = vmatprep.subr.bf16.mxu0 0
        %534 = vmatpush1.bf16.msra.mxu0 0
        %535 = vmatprep.subr.bf16.mxu0 0
        %536 = vmatpush1.bf16.msra.mxu0 0
        %537 = vmatprep.subr.bf16.mxu0 0
        %538 = vmatpush1.bf16.msra.mxu0 0
        %539 = vmatprep.subr.bf16.mxu0 0
        %540 = vmatpush1.bf16.msra.mxu0 0
        %541 = vmatprep.subr.bf16.mxu0 0
        %542 = vmatpush1.bf16.msra.mxu0 %v525
        %543 = vmatprep.subr.bf16.mxu0 0
        %544 = vmatpush2.bf16.msra.mxu0 0
        %545 = vmatprep.subr.bf16.mxu0 0
        %546 = vmatpush2.bf16.msra.mxu0 0
        %547 = vmatprep.subr.bf16.mxu0 0
        %548 = vmatpush2.bf16.msra.mxu0 0
        %549 = vmatprep.subr.bf16.mxu0 0
        %550 = vmatpush2.bf16.msra.mxu0 0
        %551 = vmatprep.subr.bf16.mxu0 0
        %552 = vmatpush2.bf16.msra.mxu0 0
        %553 = vmatprep.subr.bf16.mxu0 0
        %554 = vmatpush2.bf16.msra.mxu0 0
        %555 = vmatprep.subr.bf16.mxu0 0
        %556 = vmatpush2.bf16.msra.mxu0 0
        %557 = vmatprep.subr.bf16.mxu0 0
        %558 = vmatpush2.bf16.msra.mxu0 0
        %559 = vmatprep.mubr.bf16.mxu0 0
        %560 = vmatmul.mubr.bf16.gmra.mxu0 %v522
        %v561 = vpop.f32.mrf.mxu0
        %v562 = vadd.f32 0.0, %v561
        %v563 = vpop.f32.mrf.mxu0
        %v564 = vpop.f32.mrf.mxu0
        %v565 = vpop.f32.mrf.mxu0
        %566 = vdwg.mxu0
        %v567 = vadd.f32 %v510, %v562
        %v568 = vld [vmem:[%s326 + $0x10] sm:$0xf]
        %v569 = vld [vmem:[%s1 + $0x4] sm:$0x1]
        %v570 = vmul.f32 %v341, %v569
        %v571 = vlaneseq
        %v572 = vshrl.u32 %v571, 7
        %v573 = vsub.s32 0, %v572
        %v574 = vrot.slane %v570, %v573
        %v575 = vadd.f32 %v568, %v574
        %v576 = vld [vmem:[%s5 + $0x10] sm:$0xf]
        %v577 = vpack.c.bf16 %v575, %v575
        %v579 = vsel %vm360, %v576, 0
        %v582 = vsel %vm364, %v577, 0
        %584 = vmatprep.subr.bf16.mxu0 0
        %585 = vmatpush1.bf16.msra.mxu0 0
        %586 = vmatprep.subr.bf16.mxu0 0
        %587 = vmatpush1.bf16.msra.mxu0 0
        %588 = vmatprep.subr.bf16.mxu0 0
        %589 = vmatpush1.bf16.msra.mxu0 0
        %590 = vmatprep.subr.bf16.mxu0 0
        %591 = vmatpush1.bf16.msra.mxu0 0
        %592 = vmatprep.subr.bf16.mxu0 0
        %593 = vmatpush1.bf16.msra.mxu0 0
        %594 = vmatprep.subr.bf16.mxu0 0
        %595 = vmatpush1.bf16.msra.mxu0 0
        %596 = vmatprep.subr.bf16.mxu0 0
        %597 = vmatpush1.bf16.msra.mxu0 0
        %598 = vmatprep.subr.bf16.mxu0 0
        %599 = vmatpush1.bf16.msra.mxu0 %v582
        %600 = vmatprep.subr.bf16.mxu0 0
        %601 = vmatpush2.bf16.msra.mxu0 0
        %602 = vmatprep.subr.bf16.mxu0 0
        %603 = vmatpush2.bf16.msra.mxu0 0
        %604 = vmatprep.subr.bf16.mxu0 0
        %605 = vmatpush2.bf16.msra.mxu0 0
        %606 = vmatprep.subr.bf16.mxu0 0
        %607 = vmatpush2.bf16.msra.mxu0 0
        %608 = vmatprep.subr.bf16.mxu0 0
        %609 = vmatpush2.bf16.msra.mxu0 0
        %610 = vmatprep.subr.bf16.mxu0 0
        %611 = vmatpush2.bf16.msra.mxu0 0
        %612 = vmatprep.subr.bf16.mxu0 0
        %613 = vmatpush2.bf16.msra.mxu0 0
        %614 = vmatprep.subr.bf16.mxu0 0
        %615 = vmatpush2.bf16.msra.mxu0 0
        %616 = vmatprep.mubr.bf16.mxu0 0
        %617 = vmatmul.mubr.bf16.gmra.mxu0 %v579
        %v618 = vpop.f32.mrf.mxu0
        %v619 = vadd.f32 0.0, %v618
        %v620 = vpop.f32.mrf.mxu0
        %v621 = vpop.f32.mrf.mxu0
        %v622 = vpop.f32.mrf.mxu0
        %623 = vdwg.mxu0
        %v624 = vadd.f32 %v567, %v619
        %v625 = vld [vmem:[%s326 + $0x14] sm:$0xf]
        %v626 = vld [vmem:[%s1 + $0x5] sm:$0x1]
        %v627 = vmul.f32 %v341, %v626
        %v628 = vlaneseq
        %v629 = vshrl.u32 %v628, 7
        %v630 = vsub.s32 0, %v629
        %v631 = vrot.slane %v627, %v630
        %v632 = vadd.f32 %v625, %v631
        %v633 = vld [vmem:[%s5 + $0x14] sm:$0xf]
        %v634 = vpack.c.bf16 %v632, %v632
        %v636 = vsel %vm360, %v633, 0
        %v639 = vsel %vm364, %v634, 0
        %641 = vmatprep.subr.bf16.mxu0 0
        %642 = vmatpush1.bf16.msra.mxu0 0
        %643 = vmatprep.subr.bf16.mxu0 0
        %644 = vmatpush1.bf16.msra.mxu0 0
        %645 = vmatprep.subr.bf16.mxu0 0
        %646 = vmatpush1.bf16.msra.mxu0 0
        %647 = vmatprep.subr.bf16.mxu0 0
        %648 = vmatpush1.bf16.msra.mxu0 0
        %649 = vmatprep.subr.bf16.mxu0 0
        %650 = vmatpush1.bf16.msra.mxu0 0
        %651 = vmatprep.subr.bf16.mxu0 0
        %652 = vmatpush1.bf16.msra.mxu0 0
        %653 = vmatprep.subr.bf16.mxu0 0
        %654 = vmatpush1.bf16.msra.mxu0 0
        %655 = vmatprep.subr.bf16.mxu0 0
        %656 = vmatpush1.bf16.msra.mxu0 %v639
        %657 = vmatprep.subr.bf16.mxu0 0
        %658 = vmatpush2.bf16.msra.mxu0 0
        %659 = vmatprep.subr.bf16.mxu0 0
        %660 = vmatpush2.bf16.msra.mxu0 0
        %661 = vmatprep.subr.bf16.mxu0 0
        %662 = vmatpush2.bf16.msra.mxu0 0
        %663 = vmatprep.subr.bf16.mxu0 0
        %664 = vmatpush2.bf16.msra.mxu0 0
        %665 = vmatprep.subr.bf16.mxu0 0
        %666 = vmatpush2.bf16.msra.mxu0 0
        %667 = vmatprep.subr.bf16.mxu0 0
        %668 = vmatpush2.bf16.msra.mxu0 0
        %669 = vmatprep.subr.bf16.mxu0 0
        %670 = vmatpush2.bf16.msra.mxu0 0
        %671 = vmatprep.subr.bf16.mxu0 0
        %672 = vmatpush2.bf16.msra.mxu0 0
        %673 = vmatprep.mubr.bf16.mxu0 0
        %674 = vmatmul.mubr.bf16.gmra.mxu0 %v636
        %v675 = vpop.f32.mrf.mxu0
        %v676 = vadd.f32 0.0, %v675
        %v677 = vpop.f32.mrf.mxu0
        %v678 = vpop.f32.mrf.mxu0
        %v679 = vpop.f32.mrf.mxu0
        %680 = vdwg.mxu0
        %v681 = vadd.f32 %v624, %v676
        %v682 = vld [vmem:[%s326 + $0x18] sm:$0xf]
        %v683 = vld [vmem:[%s1 + $0x6] sm:$0x1]
        %v684 = vmul.f32 %v341, %v683
        %v685 = vlaneseq
        %v686 = vshrl.u32 %v685, 7
        %v687 = vsub.s32 0, %v686
        %v688 = vrot.slane %v684, %v687
        %v689 = vadd.f32 %v682, %v688
        %v690 = vld [vmem:[%s5 + $0x18] sm:$0xf]
        %v691 = vpack.c.bf16 %v689, %v689
        %v693 = vsel %vm360, %v690, 0
        %v696 = vsel %vm364, %v691, 0
        %698 = vmatprep.subr.bf16.mxu0 0
        %699 = vmatpush1.bf16.msra.mxu0 0
        %700 = vmatprep.subr.bf16.mxu0 0
        %701 = vmatpush1.bf16.msra.mxu0 0
        %702 = vmatprep.subr.bf16.mxu0 0
        %703 = vmatpush1.bf16.msra.mxu0 0
        %704 = vmatprep.subr.bf16.mxu0 0
        %705 = vmatpush1.bf16.msra.mxu0 0
        %706 = vmatprep.subr.bf16.mxu0 0
        %707 = vmatpush1.bf16.msra.mxu0 0
        %708 = vmatprep.subr.bf16.mxu0 0
        %709 = vmatpush1.bf16.msra.mxu0 0
        %710 = vmatprep.subr.bf16.mxu0 0
        %711 = vmatpush1.bf16.msra.mxu0 0
        %712 = vmatprep.subr.bf16.mxu0 0
        %713 = vmatpush1.bf16.msra.mxu0 %v696
        %714 = vmatprep.subr.bf16.mxu0 0
        %715 = vmatpush2.bf16.msra.mxu0 0
        %716 = vmatprep.subr.bf16.mxu0 0
        %717 = vmatpush2.bf16.msra.mxu0 0
        %718 = vmatprep.subr.bf16.mxu0 0
        %719 = vmatpush2.bf16.msra.mxu0 0
        %720 = vmatprep.subr.bf16.mxu0 0
        %721 = vmatpush2.bf16.msra.mxu0 0
        %722 = vmatprep.subr.bf16.mxu0 0
        %723 = vmatpush2.bf16.msra.mxu0 0
        %724 = vmatprep.subr.bf16.mxu0 0
        %725 = vmatpush2.bf16.msra.mxu0 0
        %726 = vmatprep.subr.bf16.mxu0 0
        %727 = vmatpush2.bf16.msra.mxu0 0
        %728 = vmatprep.subr.bf16.mxu0 0
        %729 = vmatpush2.bf16.msra.mxu0 0
        %730 = vmatprep.mubr.bf16.mxu0 0
        %731 = vmatmul.mubr.bf16.gmra.mxu0 %v693
        %v732 = vpop.f32.mrf.mxu0
        %v733 = vadd.f32 0.0, %v732
        %v734 = vpop.f32.mrf.mxu0
        %v735 = vpop.f32.mrf.mxu0
        %v736 = vpop.f32.mrf.mxu0
        %737 = vdwg.mxu0
        %v738 = vadd.f32 %v681, %v733
        %v739 = vld [vmem:[%s326 + $0x1c] sm:$0xf]
        %v740 = vld [vmem:[%s1 + $0x7] sm:$0x1]
        %v741 = vmul.f32 %v341, %v740
        %v742 = vlaneseq
        %v743 = vshrl.u32 %v742, 7
        %v744 = vsub.s32 0, %v743
        %v745 = vrot.slane %v741, %v744
        %v746 = vadd.f32 %v739, %v745
        %v747 = vld [vmem:[%s5 + $0x1c] sm:$0xf]
        %v748 = vpack.c.bf16 %v746, %v746
        %v750 = vsel %vm360, %v747, 0
        %v753 = vsel %vm364, %v748, 0
        %755 = vmatprep.subr.bf16.mxu0 0
        %756 = vmatpush1.bf16.msra.mxu0 0
        %757 = vmatprep.subr.bf16.mxu0 0
        %758 = vmatpush1.bf16.msra.mxu0 0
        %759 = vmatprep.subr.bf16.mxu0 0
        %760 = vmatpush1.bf16.msra.mxu0 0
        %761 = vmatprep.subr.bf16.mxu0 0
        %762 = vmatpush1.bf16.msra.mxu0 0
        %763 = vmatprep.subr.bf16.mxu0 0
        %764 = vmatpush1.bf16.msra.mxu0 0
        %765 = vmatprep.subr.bf16.mxu0 0
        %766 = vmatpush1.bf16.msra.mxu0 0
        %767 = vmatprep.subr.bf16.mxu0 0
        %768 = vmatpush1.bf16.msra.mxu0 0
        %769 = vmatprep.subr.bf16.mxu0 0
        %770 = vmatpush1.bf16.msra.mxu0 %v753
        %771 = vmatprep.subr.bf16.mxu0 0
        %772 = vmatpush2.bf16.msra.mxu0 0
        %773 = vmatprep.subr.bf16.mxu0 0
        %774 = vmatpush2.bf16.msra.mxu0 0
        %775 = vmatprep.subr.bf16.mxu0 0
        %776 = vmatpush2.bf16.msra.mxu0 0
        %777 = vmatprep.subr.bf16.mxu0 0
        %778 = vmatpush2.bf16.msra.mxu0 0
        %779 = vmatprep.subr.bf16.mxu0 0
        %780 = vmatpush2.bf16.msra.mxu0 0
        %781 = vmatprep.subr.bf16.mxu0 0
        %782 = vmatpush2.bf16.msra.mxu0 0
        %783 = vmatprep.subr.bf16.mxu0 0
        %784 = vmatpush2.bf16.msra.mxu0 0
        %785 = vmatprep.subr.bf16.mxu0 0
        %786 = vmatpush2.bf16.msra.mxu0 0
        %787 = vmatprep.mubr.bf16.mxu0 0
        %788 = vmatmul.mubr.bf16.gmra.mxu0 %v750
        %v789 = vpop.f32.mrf.mxu0
        %v790 = vadd.f32 0.0, %v789
        %v791 = vpop.f32.mrf.mxu0
        %v792 = vpop.f32.mrf.mxu0
        %v793 = vpop.f32.mrf.mxu0
        %794 = vdwg.mxu0
        %v795 = vadd.f32 %v738, %v790
        %v796 = vld [vmem:[%s326 + $0x20] sm:$0xf]
        %v797 = vld [vmem:[%s1 + $0x8] sm:$0x1]
        %v798 = vmul.f32 %v341, %v797
        %v799 = vlaneseq
        %v800 = vshrl.u32 %v799, 7
        %v801 = vsub.s32 0, %v800
        %v802 = vrot.slane %v798, %v801
        %v803 = vadd.f32 %v796, %v802
        %v804 = vld [vmem:[%s5 + $0x20] sm:$0xf]
        %v805 = vpack.c.bf16 %v803, %v803
        %v807 = vsel %vm360, %v804, 0
        %v810 = vsel %vm364, %v805, 0
        %812 = vmatprep.subr.bf16.mxu0 0
        %813 = vmatpush1.bf16.msra.mxu0 0
        %814 = vmatprep.subr.bf16.mxu0 0
        %815 = vmatpush1.bf16.msra.mxu0 0
        %816 = vmatprep.subr.bf16.mxu0 0
        %817 = vmatpush1.bf16.msra.mxu0 0
        %818 = vmatprep.subr.bf16.mxu0 0
        %819 = vmatpush1.bf16.msra.mxu0 0
        %820 = vmatprep.subr.bf16.mxu0 0
        %821 = vmatpush1.bf16.msra.mxu0 0
        %822 = vmatprep.subr.bf16.mxu0 0
        %823 = vmatpush1.bf16.msra.mxu0 0
        %824 = vmatprep.subr.bf16.mxu0 0
        %825 = vmatpush1.bf16.msra.mxu0 0
        %826 = vmatprep.subr.bf16.mxu0 0
        %827 = vmatpush1.bf16.msra.mxu0 %v810
        %828 = vmatprep.subr.bf16.mxu0 0
        %829 = vmatpush2.bf16.msra.mxu0 0
        %830 = vmatprep.subr.bf16.mxu0 0
        %831 = vmatpush2.bf16.msra.mxu0 0
        %832 = vmatprep.subr.bf16.mxu0 0
        %833 = vmatpush2.bf16.msra.mxu0 0
        %834 = vmatprep.subr.bf16.mxu0 0
        %835 = vmatpush2.bf16.msra.mxu0 0
        %836 = vmatprep.subr.bf16.mxu0 0
        %837 = vmatpush2.bf16.msra.mxu0 0
        %838 = vmatprep.subr.bf16.mxu0 0
        %839 = vmatpush2.bf16.msra.mxu0 0
        %840 = vmatprep.subr.bf16.mxu0 0
        %841 = vmatpush2.bf16.msra.mxu0 0
        %842 = vmatprep.subr.bf16.mxu0 0
        %843 = vmatpush2.bf16.msra.mxu0 0
        %844 = vmatprep.mubr.bf16.mxu0 0
        %845 = vmatmul.mubr.bf16.gmra.mxu0 %v807
        %v846 = vpop.f32.mrf.mxu0
        %v847 = vadd.f32 0.0, %v846
        %v848 = vpop.f32.mrf.mxu0
        %v849 = vpop.f32.mrf.mxu0
        %v850 = vpop.f32.mrf.mxu0
        %851 = vdwg.mxu0
        %v852 = vadd.f32 %v795, %v847
        %v853 = vstv %s337
        %v854 = vadd.f32 %v852, %v853
        %v855 = vmax.f32 %v854, 0.0
        %v856 = vstv %s338
        %v857 = vadd.f32 %v855, %v856
        %v858 = vld [vmem:[%s7] sm:$0xf]
        %v859 = vld [vmem:[%s330] sm:$0xf]
        %v860 = vmax.f32 %v859, 0.0
        %v861 = vpack.c.bf16 %v860, %v860
        %v863 = vsel %vm360, %v858, 0
        %v866 = vsel %vm364, %v861, 0
        %868 = vmatprep.subr.bf16.mxu0 0
        %869 = vmatpush1.bf16.msra.mxu0 0
        %870 = vmatprep.subr.bf16.mxu0 0
        %871 = vmatpush1.bf16.msra.mxu0 0
        %872 = vmatprep.subr.bf16.mxu0 0
        %873 = vmatpush1.bf16.msra.mxu0 0
        %874 = vmatprep.subr.bf16.mxu0 0
        %875 = vmatpush1.bf16.msra.mxu0 0
        %876 = vmatprep.subr.bf16.mxu0 0
        %877 = vmatpush1.bf16.msra.mxu0 0
        %878 = vmatprep.subr.bf16.mxu0 0
        %879 = vmatpush1.bf16.msra.mxu0 0
        %880 = vmatprep.subr.bf16.mxu0 0
        %881 = vmatpush1.bf16.msra.mxu0 0
        %882 = vmatprep.subr.bf16.mxu0 0
        %883 = vmatpush1.bf16.msra.mxu0 %v866
        %884 = vmatprep.subr.bf16.mxu0 0
        %885 = vmatpush2.bf16.msra.mxu0 0
        %886 = vmatprep.subr.bf16.mxu0 0
        %887 = vmatpush2.bf16.msra.mxu0 0
        %888 = vmatprep.subr.bf16.mxu0 0
        %889 = vmatpush2.bf16.msra.mxu0 0
        %890 = vmatprep.subr.bf16.mxu0 0
        %891 = vmatpush2.bf16.msra.mxu0 0
        %892 = vmatprep.subr.bf16.mxu0 0
        %893 = vmatpush2.bf16.msra.mxu0 0
        %894 = vmatprep.subr.bf16.mxu0 0
        %895 = vmatpush2.bf16.msra.mxu0 0
        %896 = vmatprep.subr.bf16.mxu0 0
        %897 = vmatpush2.bf16.msra.mxu0 0
        %898 = vmatprep.subr.bf16.mxu0 0
        %899 = vmatpush2.bf16.msra.mxu0 0
        %900 = vmatprep.mubr.bf16.mxu0 0
        %901 = vmatmul.mubr.bf16.gmra.mxu0 %v863
        %v902 = vpop.f32.mrf.mxu0
        %v903 = vadd.f32 0.0, %v902
        %v904 = vpop.f32.mrf.mxu0
        %v905 = vpop.f32.mrf.mxu0
        %v906 = vpop.f32.mrf.mxu0
        %907 = vdwg.mxu0
        %s908 = sld [smem:[#allocation3 + $0x3]]
        %s909 = sld [smem:[#allocation3 + $0x4]]
        %910 = vst [vmem:[#allocation2] sm:$0xff] 0.0
        %vm911 = vcmask 1048064
        %912 = vst.msk [vmem:[#allocation2 + $0x8] sm:$0xff] %vm911, 0.0
        %vm913 = vcmask 523264
        %914 = vst.msk [vmem:[#allocation2 + $0x10] sm:$0xff] %vm913, 0.0
        %915 = vst.msk [vmem:[#allocation2 + $0x8] sm:$0xff] %vm913, %v857
        %v916 = vld [vmem:[#allocation2] sm:$0xff]
        %v917 = vld [vmem:[#allocation2 + $0x8] sm:$0xff]
        %v918 = vld [vmem:[%s2] sm:$0x1]
        %v919 = vlaneseq
        %v920 = vshrl.u32 %v919, 7
        %v921 = vsub.s32 0, %v920
        %v922 = vrot.slane %v918, %v921
        %924 = vrot.lane.b32.xlu0 %v922, 119
        %v925 = vpop.permute.xlu0 %924
        %v927 = vmul.f32 %v916, %v925
        %v928 = vmul.f32 %v917, %v925
        %v929 = vld [vmem:[%s6] sm:$0xf]
        %v930 = vpack.c.bf16 %v927, %v927
        %v931 = vpack.c.bf16 %v928, %v928
        %v932 = vld [vmem:[%s2 + $0x1] sm:$0x1]
        %v933 = vlaneseq
        %v934 = vshrl.u32 %v933, 7
        %v935 = vsub.s32 0, %v934
        %v936 = vrot.slane %v932, %v935
        %938 = vrot.lane.b32.xlu0 %v936, 120
        %v939 = vpop.permute.xlu0 %938
        %v941 = vmul.f32 %v916, %v939
        %v942 = vmul.f32 %v917, %v939
        %v943 = vld [vmem:[%s6 + $0x4] sm:$0xf]
        %v944 = vpack.c.bf16 %v941, %v941
        %v945 = vpack.c.bf16 %v942, %v942
        %948 = vrot.lane.b32.xlu0 %v944, 8
        %v949 = vpop.permute.xlu0 %948
        %950 = vrot.lane.b32.xlu0 %v945, 8
        %v951 = vpop.permute.xlu0 %950
        %vm952 = vcmask 64512
        %v953 = vsel %vm952, %v949, %v951
        %vm954 = vcmask 64512
        %v956 = vsel %vm954, %v943, 0
        %vm958 = vcmask 1043456
        %v960 = vsel %vm958, %v953, 0
        %962 = vmatprep.subr.bf16.mxu0 0
        %963 = vmatpush1.bf16.msra.mxu0 0
        %964 = vmatprep.subr.bf16.mxu0 0
        %965 = vmatpush1.bf16.msra.mxu0 0
        %966 = vmatprep.subr.bf16.mxu0 0
        %967 = vmatpush1.bf16.msra.mxu0 0
        %968 = vmatprep.subr.bf16.mxu0 0
        %969 = vmatpush1.bf16.msra.mxu0 0
        %970 = vmatprep.subr.bf16.mxu0 0
        %971 = vmatpush1.bf16.msra.mxu0 0
        %972 = vmatprep.subr.bf16.mxu0 0
        %973 = vmatpush1.bf16.msra.mxu0 0
        %974 = vmatprep.subr.bf16.mxu0 0
        %975 = vmatpush1.bf16.msra.mxu0 0
        %976 = vmatprep.subr.bf16.mxu0 0
        %977 = vmatpush1.bf16.msra.mxu0 %v960
        %978 = vmatprep.subr.bf16.mxu0 0
        %979 = vmatpush2.bf16.msra.mxu0 0
        %980 = vmatprep.subr.bf16.mxu0 0
        %981 = vmatpush2.bf16.msra.mxu0 0
        %982 = vmatprep.subr.bf16.mxu0 0
        %983 = vmatpush2.bf16.msra.mxu0 0
        %984 = vmatprep.subr.bf16.mxu0 0
        %985 = vmatpush2.bf16.msra.mxu0 0
        %986 = vmatprep.subr.bf16.mxu0 0
        %987 = vmatpush2.bf16.msra.mxu0 0
        %988 = vmatprep.subr.bf16.mxu0 0
        %989 = vmatpush2.bf16.msra.mxu0 0
        %990 = vmatprep.subr.bf16.mxu0 0
        %991 = vmatpush2.bf16.msra.mxu0 0
        %992 = vmatprep.subr.bf16.mxu0 0
        %993 = vmatpush2.bf16.msra.mxu0 0
        %994 = vmatprep.mubr.bf16.mxu0 0
        %995 = vmatmul.mubr.bf16.gmra.mxu0 %v956
        %v996 = vpop.f32.mrf.mxu0
        %v997 = vadd.f32 0.0, %v996
        %v998 = vpop.f32.mrf.mxu0
        %v999 = vpop.f32.mrf.mxu0
        %v1000 = vpop.f32.mrf.mxu0
        %1001 = vdwg.mxu0
        %1004 = vrot.lane.b32.xlu0 %v930, 9
        %v1005 = vpop.permute.xlu0 %1004
        %1006 = vrot.lane.b32.xlu0 %v931, 9
        %v1007 = vpop.permute.xlu0 %1006
        %vm1008 = vcmask 72704
        %v1009 = vsel %vm1008, %v1005, %v1007
        %v1011 = vsel %vm954, %v929, 0
        %v1014 = vsel %vm958, %v1009, 0
        %1016 = vmatprep.subr.bf16.mxu0 0
        %1017 = vmatpush1.bf16.msra.mxu0 0
        %1018 = vmatprep.subr.bf16.mxu0 0
        %1019 = vmatpush1.bf16.msra.mxu0 0
        %1020 = vmatprep.subr.bf16.mxu0 0
        %1021 = vmatpush1.bf16.msra.mxu0 0
        %1022 = vmatprep.subr.bf16.mxu0 0
        %1023 = vmatpush1.bf16.msra.mxu0 0
        %1024 = vmatprep.subr.bf16.mxu0 0
        %1025 = vmatpush1.bf16.msra.mxu0 0
        %1026 = vmatprep.subr.bf16.mxu0 0
        %1027 = vmatpush1.bf16.msra.mxu0 0
        %1028 = vmatprep.subr.bf16.mxu0 0
        %1029 = vmatpush1.bf16.msra.mxu0 0
        %1030 = vmatprep.subr.bf16.mxu0 0
        %1031 = vmatpush1.bf16.msra.mxu0 %v1014
        %1032 = vmatprep.subr.bf16.mxu0 0
        %1033 = vmatpush2.bf16.msra.mxu0 0
        %1034 = vmatprep.subr.bf16.mxu0 0
        %1035 = vmatpush2.bf16.msra.mxu0 0
        %1036 = vmatprep.subr.bf16.mxu0 0
        %1037 = vmatpush2.bf16.msra.mxu0 0
        %1038 = vmatprep.subr.bf16.mxu0 0
        %1039 = vmatpush2.bf16.msra.mxu0 0
        %1040 = vmatprep.subr.bf16.mxu0 0
        %1041 = vmatpush2.bf16.msra.mxu0 0
        %1042 = vmatprep.subr.bf16.mxu0 0
        %1043 = vmatpush2.bf16.msra.mxu0 0
        %1044 = vmatprep.subr.bf16.mxu0 0
        %1045 = vmatpush2.bf16.msra.mxu0 0
        %1046 = vmatprep.subr.bf16.mxu0 0
        %1047 = vmatpush2.bf16.msra.mxu0 0
        %1048 = vmatprep.mubr.bf16.mxu0 0
        %1049 = vmatmul.mubr.bf16.gmra.mxu0 %v1011
        %v1050 = vpop.f32.mrf.mxu0
        %v1051 = vadd.f32 %v997, %v1050
        %v1052 = vpop.f32.mrf.mxu0
        %v1053 = vpop.f32.mrf.mxu0
        %v1054 = vpop.f32.mrf.mxu0
        %1055 = vdwg.mxu0
        %v1056 = vld [vmem:[%s2 + $0x2] sm:$0x1]
        %v1057 = vlaneseq
        %v1058 = vshrl.u32 %v1057, 7
        %v1059 = vsub.s32 0, %v1058
        %v1060 = vrot.slane %v1056, %v1059
        %1062 = vrot.lane.b32.xlu0 %v1060, 121
        %v1063 = vpop.permute.xlu0 %1062
        %v1065 = vmul.f32 %v916, %v1063
        %v1066 = vmul.f32 %v917, %v1063
        %v1067 = vld [vmem:[%s6 + $0x8] sm:$0xf]
        %v1068 = vpack.c.bf16 %v1065, %v1065
        %v1069 = vpack.c.bf16 %v1066, %v1066
        %1072 = vrot.lane.b32.xlu0 %v1068, 7
        %v1073 = vpop.permute.xlu0 %1072
        %1074 = vrot.lane.b32.xlu0 %v1069, 7
        %v1075 = vpop.permute.xlu0 %1074
        %vm1076 = vcmask 56320
        %v1077 = vsel %vm1076, %v1073, %v1075
        %v1079 = vsel %vm954, %v1067, 0
        %v1082 = vsel %vm958, %v1077, 0
        %1084 = vmatprep.subr.bf16.mxu0 0
        %1085 = vmatpush1.bf16.msra.mxu0 0
        %1086 = vmatprep.subr.bf16.mxu0 0
        %1087 = vmatpush1.bf16.msra.mxu0 0
        %1088 = vmatprep.subr.bf16.mxu0 0
        %1089 = vmatpush1.bf16.msra.mxu0 0
        %1090 = vmatprep.subr.bf16.mxu0 0
        %1091 = vmatpush1.bf16.msra.mxu0 0
        %1092 = vmatprep.subr.bf16.mxu0 0
        %1093 = vmatpush1.bf16.msra.mxu0 0
        %1094 = vmatprep.subr.bf16.mxu0 0
        %1095 = vmatpush1.bf16.msra.mxu0 0
        %1096 = vmatprep.subr.bf16.mxu0 0
        %1097 = vmatpush1.bf16.msra.mxu0 0
        %1098 = vmatprep.subr.bf16.mxu0 0
        %1099 = vmatpush1.bf16.msra.mxu0 %v1082
        %1100 = vmatprep.subr.bf16.mxu0 0
        %1101 = vmatpush2.bf16.msra.mxu0 0
        %1102 = vmatprep.subr.bf16.mxu0 0
        %1103 = vmatpush2.bf16.msra.mxu0 0
        %1104 = vmatprep.subr.bf16.mxu0 0
        %1105 = vmatpush2.bf16.msra.mxu0 0
        %1106 = vmatprep.subr.bf16.mxu0 0
        %1107 = vmatpush2.bf16.msra.mxu0 0
        %1108 = vmatprep.subr.bf16.mxu0 0
        %1109 = vmatpush2.bf16.msra.mxu0 0
        %1110 = vmatprep.subr.bf16.mxu0 0
        %1111 = vmatpush2.bf16.msra.mxu0 0
        %1112 = vmatprep.subr.bf16.mxu0 0
        %1113 = vmatpush2.bf16.msra.mxu0 0
        %1114 = vmatprep.subr.bf16.mxu0 0
        %1115 = vmatpush2.bf16.msra.mxu0 0
        %1116 = vmatprep.mubr.bf16.mxu0 0
        %1117 = vmatmul.mubr.bf16.gmra.mxu0 %v1079
        %v1118 = vpop.f32.mrf.mxu0
        %v1119 = vadd.f32 0.0, %v1118
        %v1120 = vpop.f32.mrf.mxu0
        %v1121 = vpop.f32.mrf.mxu0
        %v1122 = vpop.f32.mrf.mxu0
        %1123 = vdwg.mxu0
        %v1124 = vadd.f32 %v1051, %v1119
        %v1125 = vld [vmem:[%s2 + $0x3] sm:$0x1]
        %v1126 = vlaneseq
        %v1127 = vshrl.u32 %v1126, 7
        %v1128 = vsub.s32 0, %v1127
        %v1129 = vrot.slane %v1125, %v1128
        %1131 = vrot.lane.b32.xlu0 %v1129, 127
        %v1132 = vpop.permute.xlu0 %1131
        %v1134 = vmul.f32 %v916, %v1132
        %v1135 = vmul.f32 %v917, %v1132
        %v1136 = vld [vmem:[%s6 + $0xc] sm:$0xf]
        %v1137 = vpack.c.bf16 %v1134, %v1134
        %v1138 = vpack.c.bf16 %v1135, %v1135
        %1141 = vrot.lane.b32.xlu0 %v1137, 1
        %v1142 = vpop.permute.xlu0 %1141
        %1143 = vrot.lane.b32.xlu0 %v1138, 1
        %v1144 = vpop.permute.xlu0 %1143
        %vm1145 = vcmask 7168
        %v1146 = vsel %vm1145, %v1142, %v1144
        %v1148 = vsel %vm954, %v1136, 0
        %v1151 = vsel %vm958, %v1146, 0
        %1153 = vmatprep.subr.bf16.mxu0 0
        %1154 = vmatpush1.bf16.msra.mxu0 0
        %1155 = vmatprep.subr.bf16.mxu0 0
        %1156 = vmatpush1.bf16.msra.mxu0 0
        %1157 = vmatprep.subr.bf16.mxu0 0
        %1158 = vmatpush1.bf16.msra.mxu0 0
        %1159 = vmatprep.subr.bf16.mxu0 0
        %1160 = vmatpush1.bf16.msra.mxu0 0
        %1161 = vmatprep.subr.bf16.mxu0 0
        %1162 = vmatpush1.bf16.msra.mxu0 0
        %1163 = vmatprep.subr.bf16.mxu0 0
        %1164 = vmatpush1.bf16.msra.mxu0 0
        %1165 = vmatprep.subr.bf16.mxu0 0
        %1166 = vmatpush1.bf16.msra.mxu0 0
        %1167 = vmatprep.subr.bf16.mxu0 0
        %1168 = vmatpush1.bf16.msra.mxu0 %v1151
        %1169 = vmatprep.subr.bf16.mxu0 0
        %1170 = vmatpush2.bf16.msra.mxu0 0
        %1171 = vmatprep.subr.bf16.mxu0 0
        %1172 = vmatpush2.bf16.msra.mxu0 0
        %1173 = vmatprep.subr.bf16.mxu0 0
        %1174 = vmatpush2.bf16.msra.mxu0 0
        %1175 = vmatprep.subr.bf16.mxu0 0
        %1176 = vmatpush2.bf16.msra.mxu0 0
        %1177 = vmatprep.subr.bf16.mxu0 0
        %1178 = vmatpush2.bf16.msra.mxu0 0
        %1179 = vmatprep.subr.bf16.mxu0 0
        %1180 = vmatpush2.bf16.msra.mxu0 0
        %1181 = vmatprep.subr.bf16.mxu0 0
        %1182 = vmatpush2.bf16.msra.mxu0 0
        %1183 = vmatprep.subr.bf16.mxu0 0
        %1184 = vmatpush2.bf16.msra.mxu0 0
        %1185 = vmatprep.mubr.bf16.mxu0 0
        %1186 = vmatmul.mubr.bf16.gmra.mxu0 %v1148
        %v1187 = vpop.f32.mrf.mxu0
        %v1188 = vadd.f32 0.0, %v1187
        %v1189 = vpop.f32.mrf.mxu0
        %v1190 = vpop.f32.mrf.mxu0
        %v1191 = vpop.f32.mrf.mxu0
        %1192 = vdwg.mxu0
        %v1193 = vadd.f32 %v1124, %v1188
        %v1194 = vld [vmem:[%s2 + $0x4] sm:$0x1]
        %v1195 = vlaneseq
        %v1196 = vshrl.u32 %v1195, 7
        %v1197 = vsub.s32 0, %v1196
        %v1198 = vrot.slane %v1194, %v1197
        %v1199 = vmul.f32 %v917, %v1198
        %v1200 = vld [vmem:[%s6 + $0x10] sm:$0xf]
        %v1201 = vpack.c.bf16 %v1199, %v1199
        %v1203 = vsel %vm954, %v1200, 0
        %v1206 = vsel %vm958, %v1201, 0
        %1208 = vmatprep.subr.bf16.mxu0 0
        %1209 = vmatpush1.bf16.msra.mxu0 0
        %1210 = vmatprep.subr.bf16.mxu0 0
        %1211 = vmatpush1.bf16.msra.mxu0 0
        %1212 = vmatprep.subr.bf16.mxu0 0
        %1213 = vmatpush1.bf16.msra.mxu0 0
        %1214 = vmatprep.subr.bf16.mxu0 0
        %1215 = vmatpush1.bf16.msra.mxu0 0
        %1216 = vmatprep.subr.bf16.mxu0 0
        %1217 = vmatpush1.bf16.msra.mxu0 0
        %1218 = vmatprep.subr.bf16.mxu0 0
        %1219 = vmatpush1.bf16.msra.mxu0 0
        %1220 = vmatprep.subr.bf16.mxu0 0
        %1221 = vmatpush1.bf16.msra.mxu0 0
        %1222 = vmatprep.subr.bf16.mxu0 0
        %1223 = vmatpush1.bf16.msra.mxu0 %v1206
        %1224 = vmatprep.subr.bf16.mxu0 0
        %1225 = vmatpush2.bf16.msra.mxu0 0
        %1226 = vmatprep.subr.bf16.mxu0 0
        %1227 = vmatpush2.bf16.msra.mxu0 0
        %1228 = vmatprep.subr.bf16.mxu0 0
        %1229 = vmatpush2.bf16.msra.mxu0 0
        %1230 = vmatprep.subr.bf16.mxu0 0
        %1231 = vmatpush2.bf16.msra.mxu0 0
        %1232 = vmatprep.subr.bf16.mxu0 0
        %1233 = vmatpush2.bf16.msra.mxu0 0
        %1234 = vmatprep.subr.bf16.mxu0 0
        %1235 = vmatpush2.bf16.msra.mxu0 0
        %1236 = vmatprep.subr.bf16.mxu0 0
        %1237 = vmatpush2.bf16.msra.mxu0 0
        %1238 = vmatprep.subr.bf16.mxu0 0
        %1239 = vmatpush2.bf16.msra.mxu0 0
        %1240 = vmatprep.mubr.bf16.mxu0 0
        %1241 = vmatmul.mubr.bf16.gmra.mxu0 %v1203
        %v1242 = vpop.f32.mrf.mxu0
        %v1243 = vadd.f32 0.0, %v1242
        %v1244 = vpop.f32.mrf.mxu0
        %v1245 = vpop.f32.mrf.mxu0
        %v1246 = vpop.f32.mrf.mxu0
        %1247 = vdwg.mxu0
        %v1248 = vadd.f32 %v1193, %v1243
        %v1249 = vld [vmem:[%s2 + $0x5] sm:$0x1]
        %v1250 = vlaneseq
        %v1251 = vshrl.u32 %v1250, 7
        %v1252 = vsub.s32 0, %v1251
        %v1253 = vrot.slane %v1249, %v1252
        %1255 = vrot.lane.b32.xlu0 %v1253, 1
        %v1256 = vpop.permute.xlu0 %1255
        %v1258 = vmul.f32 %v917, %v1256
        %v1259 = vld [vmem:[%s6 + $0x14] sm:$0xf]
        %v1260 = vpack.c.bf16 %v1258, %v1258
        %1262 = vrot.lane.b32.xlu0 %v1260, 127
        %v1263 = vpop.permute.xlu0 %1262
        %v1265 = vsel %vm954, %v1259, 0
        %v1268 = vsel %vm958, %v1263, 0
        %1270 = vmatprep.subr.bf16.mxu0 0
        %1271 = vmatpush1.bf16.msra.mxu0 0
        %1272 = vmatprep.subr.bf16.mxu0 0
        %1273 = vmatpush1.bf16.msra.mxu0 0
        %1274 = vmatprep.subr.bf16.mxu0 0
        %1275 = vmatpush1.bf16.msra.mxu0 0
        %1276 = vmatprep.subr.bf16.mxu0 0
        %1277 = vmatpush1.bf16.msra.mxu0 0
        %1278 = vmatprep.subr.bf16.mxu0 0
        %1279 = vmatpush1.bf16.msra.mxu0 0
        %1280 = vmatprep.subr.bf16.mxu0 0
        %1281 = vmatpush1.bf16.msra.mxu0 0
        %1282 = vmatprep.subr.bf16.mxu0 0
        %1283 = vmatpush1.bf16.msra.mxu0 0
        %1284 = vmatprep.subr.bf16.mxu0 0
        %1285 = vmatpush1.bf16.msra.mxu0 %v1268
        %1286 = vmatprep.subr.bf16.mxu0 0
        %1287 = vmatpush2.bf16.msra.mxu0 0
        %1288 = vmatprep.subr.bf16.mxu0 0
        %1289 = vmatpush2.bf16.msra.mxu0 0
        %1290 = vmatprep.subr.bf16.mxu0 0
        %1291 = vmatpush2.bf16.msra.mxu0 0
        %1292 = vmatprep.subr.bf16.mxu0 0
        %1293 = vmatpush2.bf16.msra.mxu0 0
        %1294 = vmatprep.subr.bf16.mxu0 0
        %1295 = vmatpush2.bf16.msra.mxu0 0
        %1296 = vmatprep.subr.bf16.mxu0 0
        %1297 = vmatpush2.bf16.msra.mxu0 0
        %1298 = vmatprep.subr.bf16.mxu0 0
        %1299 = vmatpush2.bf16.msra.mxu0 0
        %1300 = vmatprep.subr.bf16.mxu0 0
        %1301 = vmatpush2.bf16.msra.mxu0 0
        %1302 = vmatprep.mubr.bf16.mxu0 0
        %1303 = vmatmul.mubr.bf16.gmra.mxu0 %v1265
        %v1304 = vpop.f32.mrf.mxu0
        %v1305 = vadd.f32 0.0, %v1304
        %v1306 = vpop.f32.mrf.mxu0
        %v1307 = vpop.f32.mrf.mxu0
        %v1308 = vpop.f32.mrf.mxu0
        %1309 = vdwg.mxu0
        %v1310 = vadd.f32 %v1248, %v1305
        %v1311 = vld [vmem:[%s2 + $0x6] sm:$0x1]
        %v1312 = vlaneseq
        %v1313 = vshrl.u32 %v1312, 7
        %v1314 = vsub.s32 0, %v1313
        %v1315 = vrot.slane %v1311, %v1314
        %1317 = vrot.lane.b32.xlu0 %v1315, 7
        %v1318 = vpop.permute.xlu0 %1317
        %v1320 = vmul.f32 %v917, %v1318
        %v1321 = vld [vmem:[%s6 + $0x18] sm:$0xf]
        %v1322 = vpack.c.bf16 %v1320, %v1320
        %1324 = vrot.lane.b32.xlu0 %v1322, 121
        %v1325 = vpop.permute.xlu0 %1324
        %v1327 = vsel %vm954, %v1321, 0
        %v1330 = vsel %vm958, %v1325, 0
        %1332 = vmatprep.subr.bf16.mxu0 0
        %1333 = vmatpush1.bf16.msra.mxu0 0
        %1334 = vmatprep.subr.bf16.mxu0 0
        %1335 = vmatpush1.bf16.msra.mxu0 0
        %1336 = vmatprep.subr.bf16.mxu0 0
        %1337 = vmatpush1.bf16.msra.mxu0 0
        %1338 = vmatprep.subr.bf16.mxu0 0
        %1339 = vmatpush1.bf16.msra.mxu0 0
        %1340 = vmatprep.subr.bf16.mxu0 0
        %1341 = vmatpush1.bf16.msra.mxu0 0
        %1342 = vmatprep.subr.bf16.mxu0 0
        %1343 = vmatpush1.bf16.msra.mxu0 0
        %1344 = vmatprep.subr.bf16.mxu0 0
        %1345 = vmatpush1.bf16.msra.mxu0 0
        %1346 = vmatprep.subr.bf16.mxu0 0
        %1347 = vmatpush1.bf16.msra.mxu0 %v1330
        %1348 = vmatprep.subr.bf16.mxu0 0
        %1349 = vmatpush2.bf16.msra.mxu0 0
        %1350 = vmatprep.subr.bf16.mxu0 0
        %1351 = vmatpush2.bf16.msra.mxu0 0
        %1352 = vmatprep.subr.bf16.mxu0 0
        %1353 = vmatpush2.bf16.msra.mxu0 0
        %1354 = vmatprep.subr.bf16.mxu0 0
        %1355 = vmatpush2.bf16.msra.mxu0 0
        %1356 = vmatprep.subr.bf16.mxu0 0
        %1357 = vmatpush2.bf16.msra.mxu0 0
        %1358 = vmatprep.subr.bf16.mxu0 0
        %1359 = vmatpush2.bf16.msra.mxu0 0
        %1360 = vmatprep.subr.bf16.mxu0 0
        %1361 = vmatpush2.bf16.msra.mxu0 0
        %1362 = vmatprep.subr.bf16.mxu0 0
        %1363 = vmatpush2.bf16.msra.mxu0 0
        %1364 = vmatprep.mubr.bf16.mxu0 0
        %1365 = vmatmul.mubr.bf16.gmra.mxu0 %v1327
        %v1366 = vpop.f32.mrf.mxu0
        %v1367 = vadd.f32 0.0, %v1366
        %v1368 = vpop.f32.mrf.mxu0
        %v1369 = vpop.f32.mrf.mxu0
        %v1370 = vpop.f32.mrf.mxu0
        %1371 = vdwg.mxu0
        %v1372 = vadd.f32 %v1310, %v1367
        %v1373 = vld [vmem:[%s2 + $0x7] sm:$0x1]
        %v1374 = vlaneseq
        %v1375 = vshrl.u32 %v1374, 7
        %v1376 = vsub.s32 0, %v1375
        %v1377 = vrot.slane %v1373, %v1376
        %1379 = vrot.lane.b32.xlu0 %v1377, 8
        %v1380 = vpop.permute.xlu0 %1379
        %v1382 = vmul.f32 %v917, %v1380
        %v1383 = vld [vmem:[%s6 + $0x1c] sm:$0xf]
        %v1384 = vpack.c.bf16 %v1382, %v1382
        %1386 = vrot.lane.b32.xlu0 %v1384, 120
        %v1387 = vpop.permute.xlu0 %1386
        %v1389 = vsel %vm954, %v1383, 0
        %v1392 = vsel %vm958, %v1387, 0
        %1394 = vmatprep.subr.bf16.mxu0 0
        %1395 = vmatpush1.bf16.msra.mxu0 0
        %1396 = vmatprep.subr.bf16.mxu0 0
        %1397 = vmatpush1.bf16.msra.mxu0 0
        %1398 = vmatprep.subr.bf16.mxu0 0
        %1399 = vmatpush1.bf16.msra.mxu0 0
        %1400 = vmatprep.subr.bf16.mxu0 0
        %1401 = vmatpush1.bf16.msra.mxu0 0
        %1402 = vmatprep.subr.bf16.mxu0 0
        %1403 = vmatpush1.bf16.msra.mxu0 0
        %1404 = vmatprep.subr.bf16.mxu0 0
        %1405 = vmatpush1.bf16.msra.mxu0 0
        %1406 = vmatprep.subr.bf16.mxu0 0
        %1407 = vmatpush1.bf16.msra.mxu0 0
        %1408 = vmatprep.subr.bf16.mxu0 0
        %1409 = vmatpush1.bf16.msra.mxu0 %v1392
        %1410 = vmatprep.subr.bf16.mxu0 0
        %1411 = vmatpush2.bf16.msra.mxu0 0
        %1412 = vmatprep.subr.bf16.mxu0 0
        %1413 = vmatpush2.bf16.msra.mxu0 0
        %1414 = vmatprep.subr.bf16.mxu0 0
        %1415 = vmatpush2.bf16.msra.mxu0 0
        %1416 = vmatprep.subr.bf16.mxu0 0
        %1417 = vmatpush2.bf16.msra.mxu0 0
        %1418 = vmatprep.subr.bf16.mxu0 0
        %1419 = vmatpush2.bf16.msra.mxu0 0
        %1420 = vmatprep.subr.bf16.mxu0 0
        %1421 = vmatpush2.bf16.msra.mxu0 0
        %1422 = vmatprep.subr.bf16.mxu0 0
        %1423 = vmatpush2.bf16.msra.mxu0 0
        %1424 = vmatprep.subr.bf16.mxu0 0
        %1425 = vmatpush2.bf16.msra.mxu0 0
        %1426 = vmatprep.mubr.bf16.mxu0 0
        %1427 = vmatmul.mubr.bf16.gmra.mxu0 %v1389
        %v1428 = vpop.f32.mrf.mxu0
        %v1429 = vadd.f32 0.0, %v1428
        %v1430 = vpop.f32.mrf.mxu0
        %v1431 = vpop.f32.mrf.mxu0
        %v1432 = vpop.f32.mrf.mxu0
        %1433 = vdwg.mxu0
        %v1434 = vadd.f32 %v1372, %v1429
        %v1435 = vld [vmem:[%s2 + $0x8] sm:$0x1]
        %v1436 = vlaneseq
        %v1437 = vshrl.u32 %v1436, 7
        %v1438 = vsub.s32 0, %v1437
        %v1439 = vrot.slane %v1435, %v1438
        %1441 = vrot.lane.b32.xlu0 %v1439, 9
        %v1442 = vpop.permute.xlu0 %1441
        %v1444 = vmul.f32 %v917, %v1442
        %v1445 = vld [vmem:[%s6 + $0x20] sm:$0xf]
        %v1446 = vpack.c.bf16 %v1444, %v1444
        %1448 = vrot.lane.b32.xlu0 %v1446, 119
        %v1449 = vpop.permute.xlu0 %1448
        %v1451 = vsel %vm954, %v1445, 0
        %v1454 = vsel %vm958, %v1449, 0
        %1456 = vmatprep.subr.bf16.mxu0 0
        %1457 = vmatpush1.bf16.msra.mxu0 0
        %1458 = vmatprep.subr.bf16.mxu0 0
        %1459 = vmatpush1.bf16.msra.mxu0 0
        %1460 = vmatprep.subr.bf16.mxu0 0
        %1461 = vmatpush1.bf16.msra.mxu0 0
        %1462 = vmatprep.subr.bf16.mxu0 0
        %1463 = vmatpush1.bf16.msra.mxu0 0
        %1464 = vmatprep.subr.bf16.mxu0 0
        %1465 = vmatpush1.bf16.msra.mxu0 0
        %1466 = vmatprep.subr.bf16.mxu0 0
        %1467 = vmatpush1.bf16.msra.mxu0 0
        %1468 = vmatprep.subr.bf16.mxu0 0
        %1469 = vmatpush1.bf16.msra.mxu0 0
        %1470 = vmatprep.subr.bf16.mxu0 0
        %1471 = vmatpush1.bf16.msra.mxu0 %v1454
        %1472 = vmatprep.subr.bf16.mxu0 0
        %1473 = vmatpush2.bf16.msra.mxu0 0
        %1474 = vmatprep.subr.bf16.mxu0 0
        %1475 = vmatpush2.bf16.msra.mxu0 0
        %1476 = vmatprep.subr.bf16.mxu0 0
        %1477 = vmatpush2.bf16.msra.mxu0 0
        %1478 = vmatprep.subr.bf16.mxu0 0
        %1479 = vmatpush2.bf16.msra.mxu0 0
        %1480 = vmatprep.subr.bf16.mxu0 0
        %1481 = vmatpush2.bf16.msra.mxu0 0
        %1482 = vmatprep.subr.bf16.mxu0 0
        %1483 = vmatpush2.bf16.msra.mxu0 0
        %1484 = vmatprep.subr.bf16.mxu0 0
        %1485 = vmatpush2.bf16.msra.mxu0 0
        %1486 = vmatprep.subr.bf16.mxu0 0
        %1487 = vmatpush2.bf16.msra.mxu0 0
        %1488 = vmatprep.mubr.bf16.mxu0 0
        %1489 = vmatmul.mubr.bf16.gmra.mxu0 %v1451
        %v1490 = vpop.f32.mrf.mxu0
        %v1491 = vadd.f32 0.0, %v1490
        %v1492 = vpop.f32.mrf.mxu0
        %v1493 = vpop.f32.mrf.mxu0
        %v1494 = vpop.f32.mrf.mxu0
        %1495 = vdwg.mxu0
        %v1496 = vadd.f32 %v1434, %v1491
        %v1497 = vstv %s909
        %v1498 = vmul.f32 %v1497, %v1496
        %v1499 = vstv %s908
        %v1500 = vadd.f32 %v1498, %v1499
        %v1501 = vadd.f32 %v1500, %v903
        %1502 = vst.msk [vmem:[%s334] sm:$0xff] %vm913, %v1501
        %p1503 = scmp.lt.s32.totalorder %s20, 1
        %s1504 = scalar_select %p1503, %s20, 1
        %s1505 = smul.addr %s1504, 8
        %s1506 = scalar_lea.vmem %s8, %s1505
        // Predicated region
        $region57: #{basic_block_forward.1} parent=51 // pred_check
          %p1507 = pneg %p216
        $region58: #{basic_block_forward.1} parent=51 // pred_check_branch
          %1509 = sbr.rel (%p1507) target = $region60
        $region59: #{basic_block_forward.1} parent=51 // pred_region
          _
        $region60: #{basic_block_forward.1} parent=51 // pred_fallthru
          _
      $region52: #{basic_block_forward.1} parent=5 // pred_fallthru
        _
      %p1510 = scmp.le.s32.totalorder 2, %s15
      // Predicated region
      $region61: #{basic_block_forward.1} parent=5 // pred_check
        %p1511 = pneg %p1510
      $region62: #{basic_block_forward.1} parent=5 // pred_check_branch
        %1513 = sbr.rel (%p1511) target = $region64
      $region63: #{basic_block_forward.1} parent=5 // pred_region
        %s1514 = ssub.s32 %s15, 2
        // Predicated region
        $region65: #{basic_block_forward.1} parent=63 // pred_check
          %p1515 = pneg %p222
        $region66: #{basic_block_forward.1} parent=63 // pred_check_branch
          %1517 = sbr.rel (%p1515) target = $region68
        $region67: #{basic_block_forward.1} parent=63 // pred_region
          %p1518 = scmp.lt.s32.totalorder %s21, 1
          %s1519 = scalar_select %p1518, %s21, 1
          %s1520 = smul.addr %s1519, 8
          %s1521 = scalar_lea.vmem %s8, %s1520
        $region68: #{basic_block_forward.1} parent=63 // pred_fallthru
          _
      $region64: #{basic_block_forward.1} parent=5 // pred_fallthru
        _
    $region6: #{basic_block_forward.1} parent=1 // loop_footer
      %s19 = sadd.s32 1, %s15
    $region7: #{basic_block_forward.1} parent=1 // loop_footer_branch
      %14 = sbr.rel target = $region3
    $region8: #{basic_block_forward.1} parent=1 // loop_exit
      _
    %1522 = vsyncpa [#allocation4], 1
    %s1523 = scalar_lea.sflag [#allocation4], 1
    %1524 = vsyncpa %s1523, 1

</llo_original>
